<compile_context>
chip_gen: v5e
topology: v5e:2x2
jax: 0.10.0
libtpu: 0.0.40
codegen_flags: <defaults>
</compile_context>

<pallas_src>
import functools

import jax
import jax.numpy as jnp
from jax.experimental import pallas as pl
from jax.experimental.pallas import tpu as pltpu

_EPS = 1e-5


def _lane_pad(c):
    return -(-c // 128) * 128


def _vmem_capacity_bytes():
    """Per-core VMEM capacity (generation-aware); conservative 64 MiB fallback."""
    try:
        info = pltpu.get_tpu_info()
        for name in ("vmem_capacity_bytes", "vmem_bytes", "vmem_size_bytes"):
            cap = getattr(info, name, None)
            if cap:
                return int(cap)
    except Exception:
        pass
    return 64 * 1024 * 1024


# ----------------------------------------------------------------------------
# Fused ResBlk kernel: one (batch, row-tile) output band per grid step.
# ----------------------------------------------------------------------------
def resblk_kernel(*refs, stride, tile, h_out, w_out, c_in, c_out, has_proj):
    if has_proj:
        (slab_ref, w1_ref, s1_ref, b1_ref, w2_ref, s2_ref, b2_ref,
         we_ref, se_ref, be_ref, o_ref, y1s_ref) = refs
    else:
        (slab_ref, w1_ref, s1_ref, b1_ref, w2_ref, s2_ref, b2_ref,
         o_ref, y1s_ref) = refs

    s = stride
    r1 = tile + 2                            # conv1 rows incl. conv2's 1-row halo
    row0 = pl.program_id(1) * tile
    if tile % 8 == 0:
        row0 = pl.multiple_of(row0, 8)

    def in_tap(rp, cp, rb0, cb0, nrows):
        """Unit-stride window of one (row-phase, col-phase) plane of the padded
        input: rows [rb0, rb0+nrows), cols [cb0, cb0+w_out), all channels."""
        return slab_ref[0, rp * s + cp, pl.ds(rb0, nrows), cb0:cb0 + w_out, :]

    # ---- conv1 (3x3, stride s) + folded BN1 + ReLU, per-kh accumulation ----
    acc1 = jnp.zeros((r1 * w_out, c_out), jnp.float32)
    for kh in range(3):
        taps = [in_tap(kh % s, kw % s, row0 + kh // s, kw // s, r1)
                for kw in range(3)]
        a = jnp.concatenate(taps, axis=-1).reshape(r1 * w_out, 3 * c_in)
        acc1 = acc1 + jnp.dot(a, w1_ref[kh], preferred_element_type=jnp.float32)
    y1 = jnp.maximum(acc1 * s1_ref[...] + b1_ref[...], 0.0)
    # nn.Dropout(0.5) in eval mode == identity.
    # TODO(synk): training-mode dropout mask is not implemented.

    # Halo rows lying outside the image are conv2's zero padding in H.
    rows = jax.lax.broadcasted_iota(jnp.int32, (r1, 1, 1), 0) + (row0 - 1)
    y1 = y1.reshape(r1, w_out, c_out)
    y1 = jnp.where((rows >= 0) & (rows < h_out), y1, 0.0).astype(jnp.bfloat16)

    # Stash conv1 rows into a zero-bordered scratch: conv2's W padding is free
    # (no zcol + concatenate full-tile copy).
    zc = jnp.zeros((r1, 1, c_out), jnp.bfloat16)
    y1s_ref[:, 0:1, :] = zc
    y1s_ref[:, w_out + 1:w_out + 2, :] = zc
    y1s_ref[:, 1:w_out + 1, :] = y1

    # ---- conv2 (3x3, stride 1) + folded BN2, per-kh accumulation -----------
    acc2 = jnp.zeros((tile * w_out, c_out), jnp.float32)
    for kh in range(3):
        taps = [y1s_ref[kh:kh + tile, kw:kw + w_out, :] for kw in range(3)]
        a = jnp.concatenate(taps, axis=-1).reshape(tile * w_out, 3 * c_out)
        acc2 = acc2 + jnp.dot(a, w2_ref[kh], preferred_element_type=jnp.float32)
    y2 = acc2 * s2_ref[...] + b2_ref[...]

    # ---- shortcut: 1x1 conv + BN (projection) or identity ------------------
    xs = in_tap(1 % s, 1 % s, row0 + 1 + 1 // s, 1 // s, tile)
    xs = xs.reshape(tile * w_out, c_in)
    if has_proj:
        sc = jnp.dot(xs, we_ref[...], preferred_element_type=jnp.float32)
        sc = sc * se_ref[...] + be_ref[...]
    else:
        sc = xs.astype(jnp.float32)          # identity residual from bf16 slab

    o_ref[0] = jnp.maximum(y2 + sc, 0.0).astype(o_ref.dtype)


# ----------------------------------------------------------------------------
# Tile choice (VMEM- and megacore-aware).
# ----------------------------------------------------------------------------
def _choose_tile_rows(n, h_out, w_out, c_in, c_out, stride, rb, cbk,
                      max_rows, budget):
    s = stride
    cin_p = _lane_pad(c_in)
    cout_p = _lane_pad(c_out)
    # Grid-invariant residents (pipeline double-buffers every input block).
    fixed = 2 * (s * s * rb * cbk * cin_p * 2)                       # input slab bf16
    fixed += 2 * 2 * (9 * c_in + 9 * c_out + c_in) * cout_p          # weights bf16
    fixed += 2 * 4 * 6 * cout_p                                      # scales/biases f32

    def step_bytes(t):
        r1 = t + 2
        return (fixed
                + 2 * t * w_out * cout_p * 2                # output block bf16 (2-buf)
                + r1 * (w_out + 2) * cout_p * 2             # y1 scratch bf16
                + r1 * w_out * _lane_pad(3 * c_in) * 2      # conv1 per-kh im2col
                + 2 * r1 * w_out * cout_p * 4               # acc1 / y1 f32
                + t * w_out * _lane_pad(3 * c_out) * 2      # conv2 per-kh im2col
                + 3 * t * w_out * cout_p * 4)               # acc2 / shortcut / out f32

    cands = [t for t in range(1, h_out + 1)
             if h_out % t == 0 and ((t * w_out) % 8 == 0 or t == h_out)]
    if max_rows is not None:
        picked = [t for t in cands if t <= max_rows]
        cands = picked or [min(cands)]
    if n == 1:  # megacore occupancy: give the second TensorCore >=1 row tile
        picked = [t for t in cands if h_out // t >= 2]
        cands = picked or cands
    best = min(cands)
    for t in sorted(cands):
        if step_bytes(t) <= budget:
            best = t
    return best


# ----------------------------------------------------------------------------
# Wrapper: pad (+ phase split only for stride>1), pallas_call, reshape back.
# ----------------------------------------------------------------------------
def resblk_pallas(x_nhwc, prep, *, stride, max_tile_rows=None):
    n, h, w, c_in = x_nhwc.shape
    s = stride
    assert h % s == 0 and w % s == 0, "H and W must be divisible by the stride"
    assert (w + 2) % s == 0, "W+2 must be divisible by the stride"
    c_out = prep['s1'].shape[-1]
    h_out, w_out = h // s, w // s
    has_proj = 'we' in prep

    # HBM-side prep: one pad; one phase-split transpose only when stride > 1.
    p_top = s + 1
    hp = -(-(h + s + 3) // s) * s
    p_bot = hp - h - p_top
    wp = w + 2
    xq = x_nhwc.astype(jnp.bfloat16)
    xp = jnp.pad(xq, ((0, 0), (p_top, p_bot), (1, 1), (0, 0)))
    rb, cbk = hp // s, wp // s
    if s == 1:
        slab = xp.reshape(n, 1, rb, cbk, c_in)
    else:
        slab = xp.reshape(n, rb, s, cbk, s, c_in)
        slab = jnp.transpose(slab, (0, 2, 4, 1, 3, 5)).reshape(n, s * s, rb, cbk, c_in)

    cap = _vmem_capacity_bytes()
    budget = int(cap * 0.55)
    vmem_limit = min(int(cap * 0.9), 128 * 1024 * 1024)

    tile = _choose_tile_rows(n, h_out, w_out, c_in, c_out, s, rb, cbk,
                             max_rows=max_tile_rows, budget=budget)
    t_tiles = h_out // tile

    kernel = functools.partial(resblk_kernel, stride=s, tile=tile, h_out=h_out,
                               w_out=w_out, c_in=c_in, c_out=c_out,
                               has_proj=has_proj)

    rep2 = lambda ni, ti: (0, 0)
    rep3 = lambda ni, ti: (0, 0, 0)
    in_specs = [
        pl.BlockSpec((1, s * s, rb, cbk, c_in), lambda ni, ti: (ni, 0, 0, 0, 0)),
        pl.BlockSpec(prep['w1'].shape, rep3),
        pl.BlockSpec(prep['s1'].shape, rep2),
        pl.BlockSpec(prep['b1'].shape, rep2),
        pl.BlockSpec(prep['w2'].shape, rep3),
        pl.BlockSpec(prep['s2'].shape, rep2),
        pl.BlockSpec(prep['b2'].shape, rep2),
    ]
    args = [slab, prep['w1'], prep['s1'], prep['b1'],
            prep['w2'], prep['s2'], prep['b2']]
    if has_proj:
        in_specs += [pl.BlockSpec(prep['we'].shape, rep2),
                     pl.BlockSpec(prep['se'].shape, rep2),
                     pl.BlockSpec(prep['be'].shape, rep2)]
        args += [prep['we'], prep['se'], prep['be']]

    out = pl.pallas_call(
        kernel,
        out_shape=jax.ShapeDtypeStruct((n, h_out * w_out, c_out), jnp.bfloat16),
        grid=(n, t_tiles),
        in_specs=in_specs,
        out_specs=pl.BlockSpec((1, tile * w_out, c_out),
                               lambda ni, ti: (ni, ti, 0)),
        scratch_shapes=[pltpu.VMEM((tile + 2, w_out + 2, c_out), jnp.bfloat16)],
        compiler_params=pltpu.CompilerParams(
            dimension_semantics=("parallel", "parallel"),
            vmem_limit_bytes=vmem_limit),
    )(*args)
    return out.reshape(n, h_out, w_out, c_out)


def resblk_forward(x_nhwc, prep, *, stride, max_tile_rows=None):
    """ResBlk forward: NHWC f32/bf16 in, NHWC bf16 out (no layout round trips)."""
    return resblk_pallas(x_nhwc, prep, stride=stride, max_tile_rows=max_tile_rows)


# ----------------------------------------------------------------------------
# Parameter preprocessing (hoisted out of the forward path).
# ----------------------------------------------------------------------------
def _fold_bn(conv_b, gamma, beta, mean, var):
    scale = gamma / jnp.sqrt(var + _EPS)
    bias = beta - mean * scale + conv_b * scale
    return scale, bias


def prepare_params(p):
    """Fold Conv+BN into per-channel (scale, bias), re-layout weights for the
    per-kh im2col matmuls, cast matmul operands to bf16.  Done once per model."""
    ch_out, ch_in = p['w1'].shape[0], p['w1'].shape[1]
    s1, b1 = _fold_bn(p['b1'], p['g1'], p['beta1'], p['m1'], p['v1'])
    s2, b2 = _fold_bn(p['b2'], p['g2'], p['beta2'], p['m2'], p['v2'])
    prep = {
        'w1': jnp.transpose(p['w1'], (2, 3, 1, 0))
                 .reshape(3, 3 * ch_in, ch_out).astype(jnp.bfloat16),
        's1': s1.reshape(1, ch_out).astype(jnp.float32),
        'b1': b1.reshape(1, ch_out).astype(jnp.float32),
        'w2': jnp.transpose(p['w2'], (2, 3, 1, 0))
                 .reshape(3, 3 * ch_out, ch_out).astype(jnp.bfloat16),
        's2': s2.reshape(1, ch_out).astype(jnp.float32),
        'b2': b2.reshape(1, ch_out).astype(jnp.float32),
    }
    if 'we' in p:
        se, be = _fold_bn(p['be'], p['ge'], p['betae'], p['me'], p['ve'])
        prep['we'] = jnp.transpose(p['we'][:, :, 0, 0], (1, 0)).astype(jnp.bfloat16)
        prep['se'] = se.reshape(1, ch_out).astype(jnp.float32)
        prep['be'] = be.reshape(1, ch_out).astype(jnp.float32)
    return prep


# ----------------------------------------------------------------------------
# Pure-JAX references (NHWC, no transposes).
# ----------------------------------------------------------------------------
def _conv_nhwc(x, w, stride, pad):
    return jax.lax.conv_general_dilated(
        x, w, window_strides=(stride, stride), padding=[(pad, pad), (pad, pad)],
        dimension_numbers=('NHWC', 'OIHW', 'NHWC'),
        precision=jax.lax.Precision.HIGHEST)


def resblk_reference_f32(x, p, *, stride):
    def bn(y, g, beta, m, v):
        sc = g / jnp.sqrt(v + _EPS)
        return (y - m) * sc + beta
    out = _conv_nhwc(x, p['w1'], stride, 1) + p['b1']
    out = jax.nn.relu(bn(out, p['g1'], p['beta1'], p['m1'], p['v1']))
    out = _conv_nhwc(out, p['w2'], 1, 1) + p['b2']
    out = bn(out, p['g2'], p['beta2'], p['m2'], p['v2'])
    if 'we' in p:
        scut = _conv_nhwc(x, p['we'], stride, 0) + p['be']
        scut = bn(scut, p['ge'], p['betae'], p['me'], p['ve'])
    else:
        scut = x
    return jax.nn.relu(scut + out)


def resblk_reference_bf16(x, p, *, stride):
    """Mirror of the kernel numerics: bf16 matmul inputs, f32 accumulation and
    f32 BN/residual/ReLU epilogue."""
    q = lambda a: a.astype(jnp.bfloat16).astype(jnp.float32)
    xq = q(x)
    s1, b1 = _fold_bn(p['b1'], p['g1'], p['beta1'], p['m1'], p['v1'])
    s2, b2 = _fold_bn(p['b2'], p['g2'], p['beta2'], p['m2'], p['v2'])
    y = _conv_nhwc(xq, q(p['w1']), stride, 1)
    y = jax.nn.relu(y * s1 + b1)
    y = q(y)
    y = _conv_nhwc(y, q(p['w2']), 1, 1) * s2 + b2
    if 'we' in p:
        se, be = _fold_bn(p['be'], p['ge'], p['betae'], p['me'], p['ve'])
        scut = _conv_nhwc(xq, q(p['we']), stride, 0) * se + be
    else:
        scut = xq
    return jax.nn.relu(y + scut)


# ----------------------------------------------------------------------------
# Deterministic parameter init (PyTorch layouts: conv weights OIHW).
# ----------------------------------------------------------------------------
def init_params(key, ch_in, ch_out, stride):
    keys = iter(jax.random.split(key, 18))

    def conv_w(k, co, ci, kh, kw):
        fan_in = ci * kh * kw
        return jax.random.normal(k, (co, ci, kh, kw), jnp.float32) \
            / jnp.sqrt(jnp.float32(fan_in))

    def bn(k1, k2, k3, k4, c):
        g = 1.0 + 0.1 * jax.random.normal(k1, (c,), jnp.float32)
        beta = 0.1 * jax.random.normal(k2, (c,), jnp.float32)
        m = 0.1 * jax.random.normal(k3, (c,), jnp.float32)
        v = 0.5 + jax.random.uniform(k4, (c,), jnp.float32)
        return g, beta, m, v

    p = {}
    p['w1'] = conv_w(next(keys), ch_out, ch_in, 3, 3)
    p['b1'] = 0.1 * jax.random.normal(next(keys), (ch_out,), jnp.float32)
    p['g1'], p['beta1'], p['m1'], p['v1'] = bn(next(keys), next(keys),
                                               next(keys), next(keys), ch_out)
    p['w2'] = conv_w(next(keys), ch_out, ch_out, 3, 3)
    p['b2'] = 0.1 * jax.random.normal(next(keys), (ch_out,), jnp.float32)
    p['g2'], p['beta2'], p['m2'], p['v2'] = bn(next(keys), next(keys),
                                               next(keys), next(keys), ch_out)
    if ch_in != ch_out or stride != 1:
        p['we'] = conv_w(next(keys), ch_out, ch_in, 1, 1)
        p['be'] = 0.1 * jax.random.normal(next(keys), (ch_out,), jnp.float32)
        p['ge'], p['betae'], p['me'], p['ve'] = bn(next(keys), next(keys),
                                                   next(keys), next(keys), ch_out)
    return p


# ----------------------------------------------------------------------------
if __name__ == "__main__":
    key = jax.random.PRNGKey(0)
    kx, kp1, kp2 = jax.random.split(key, 3)

    N, H, W = 2, 16, 16
    fwd = jax.jit(resblk_forward, static_argnames=("stride", "max_tile_rows"))

    # Case 1: downsampling block (ch_in != ch_out, stride=2) -> 1x1 projection.
    ch_in, ch_out, stride = 4, 8, 2
    x = jax.random.normal(kx, (N, H, W, ch_in), jnp.float32)        # NHWC
    p = init_params(kp1, ch_in, ch_out, stride)
    prep = prepare_params(p)
    out = jax.block_until_ready(fwd(x, prep, stride=stride))
    assert out.dtype == jnp.bfloat16
    out = out.astype(jnp.float32)
    ref_b = resblk_reference_bf16(x, p, stride=stride)
    ref_f = resblk_reference_f32(x, p, stride=stride)
    assert out.shape == (N, H // stride, W // stride, ch_out)
    assert float(jnp.max(jnp.abs(out - ref_b))) < 5e-2, "mismatch vs bf16 ref (downsample)"
    assert float(jnp.max(jnp.abs(out - ref_f))) < 1e-1, "mismatch vs f32 ref (downsample)"

    # Case 2: identity-shortcut block (ch_in == ch_out, stride=1).
    p2 = init_params(kp2, ch_in, ch_in, 1)
    prep2 = prepare_params(p2)
    out2 = jax.block_until_ready(fwd(x, prep2, stride=1)).astype(jnp.float32)
    ref2_b = resblk_reference_bf16(x, p2, stride=1)
    ref2_f = resblk_reference_f32(x, p2, stride=1)
    assert out2.shape == (N, H, W, ch_in)
    assert float(jnp.max(jnp.abs(out2 - ref2_b))) < 5e-2, "mismatch vs bf16 ref (identity)"
    assert float(jnp.max(jnp.abs(out2 - ref2_f))) < 1e-1, "mismatch vs f32 ref (identity)"

    # Case 3: same block, forced multi-tile grid (<=4 output rows / step) to
    # exercise the H-row tiling + halo-recompute path.
    out3 = jax.block_until_ready(fwd(x, prep2, stride=1, max_tile_rows=4))
    out3 = out3.astype(jnp.float32)
    assert out3.shape == out2.shape
    assert float(jnp.max(jnp.abs(out3 - out2))) < 5e-3, "row tiling changed the result"

    print("KERNEL_OK")
</pallas_src>

<mosaic_0001>
module attributes {stable_mosaic.version = 11 : i64} {
  func.func @resblk_kernel(%arg0: i32, %arg1: i32, %arg2: memref<1x4x11x9x4xbf16, #tpu.memory_space<vmem>>, %arg3: memref<3x12x8xbf16, #tpu.memory_space<vmem>>, %arg4: memref<1x8xf32, #tpu.memory_space<vmem>>, %arg5: memref<1x8xf32, #tpu.memory_space<vmem>>, %arg6: memref<3x24x8xbf16, #tpu.memory_space<vmem>>, %arg7: memref<1x8xf32, #tpu.memory_space<vmem>>, %arg8: memref<1x8xf32, #tpu.memory_space<vmem>>, %arg9: memref<4x8xbf16, #tpu.memory_space<vmem>>, %arg10: memref<1x8xf32, #tpu.memory_space<vmem>>, %arg11: memref<1x8xf32, #tpu.memory_space<vmem>>, %arg12: memref<1x64x8xbf16, #tpu.memory_space<vmem>>, %arg13: memref<10x10x8xbf16, #tpu.memory_space<vmem>>) attributes {dimension_semantics = [#tpu.dimension_semantics<parallel>, #tpu.dimension_semantics<parallel>], iteration_bounds = array<i64: 2, 1>, scalar_prefetch = 0 : i64, scratch_operands = 1 : i64, tpu.core_type = #tpu.core_type<tc>, window_params = [{transform_indices = @transform_0, window_bounds = array<i64: 1, 4, 11, 9, 4>}, {pipeline_mode = #tpu.pipeline_mode<synchronous>, transform_indices = @transform_1, window_bounds = array<i64: 3, 12, 8>}, {pipeline_mode = #tpu.pipeline_mode<synchronous>, transform_indices = @transform_2, window_bounds = array<i64: 1, 8>}, {pipeline_mode = #tpu.pipeline_mode<synchronous>, transform_indices = @transform_3, window_bounds = array<i64: 1, 8>}, {pipeline_mode = #tpu.pipeline_mode<synchronous>, transform_indices = @transform_4, window_bounds = array<i64: 3, 24, 8>}, {pipeline_mode = #tpu.pipeline_mode<synchronous>, transform_indices = @transform_5, window_bounds = array<i64: 1, 8>}, {pipeline_mode = #tpu.pipeline_mode<synchronous>, transform_indices = @transform_6, window_bounds = array<i64: 1, 8>}, {pipeline_mode = #tpu.pipeline_mode<synchronous>, transform_indices = @transform_7, window_bounds = array<i64: 4, 8>}, {pipeline_mode = #tpu.pipeline_mode<synchronous>, transform_indices = @transform_8, window_bounds = array<i64: 1, 8>}, {pipeline_mode = #tpu.pipeline_mode<synchronous>, transform_indices = @transform_9, window_bounds = array<i64: 1, 8>}, {transform_indices = @transform_10, window_bounds = array<i64: 1, 64, 8>}]} {
    %c8_i32 = arith.constant 8 : i32
    %0 = arith.muli %arg1, %c8_i32 : i32
    %1 = tpu.assume_multiple %0, 8 : i32
    %cst = arith.constant 0.000000e+00 : f32
    %2 = vector.broadcast %cst : f32 to vector<80x8xf32>
    %c0_i32 = arith.constant 0 : i32
    %3 = arith.addi %1, %c0_i32 : i32
    %c0 = arith.constant 0 : index
    %c0_0 = arith.constant 0 : index
    %4 = arith.index_cast %3 : i32 to index
    %c0_1 = arith.constant 0 : index
    %c0_2 = arith.constant 0 : index
    %5 = vector.load %arg2[%c0, %c0_0, %4, %c0_1, %c0_2] : memref<1x4x11x9x4xbf16, #tpu.memory_space<vmem>>, vector<1x1x10x8x4xbf16>
    %6 = vector.shape_cast %5 : vector<1x1x10x8x4xbf16> to vector<10x8x4xbf16>
    %c0_i32_3 = arith.constant 0 : i32
    %7 = arith.addi %1, %c0_i32_3 : i32
    %c0_4 = arith.constant 0 : index
    %c1 = arith.constant 1 : index
    %8 = arith.index_cast %7 : i32 to index
    %c0_5 = arith.constant 0 : index
    %c0_6 = arith.constant 0 : index
    %9 = vector.load %arg2[%c0_4, %c1, %8, %c0_5, %c0_6] : memref<1x4x11x9x4xbf16, #tpu.memory_space<vmem>>, vector<1x1x10x8x4xbf16>
    %10 = vector.shape_cast %9 : vector<1x1x10x8x4xbf16> to vector<10x8x4xbf16>
    %c0_i32_7 = arith.constant 0 : i32
    %11 = arith.addi %1, %c0_i32_7 : i32
    %c0_8 = arith.constant 0 : index
    %c0_9 = arith.constant 0 : index
    %12 = arith.index_cast %11 : i32 to index
    %c1_10 = arith.constant 1 : index
    %c0_11 = arith.constant 0 : index
    %13 = vector.load %arg2[%c0_8, %c0_9, %12, %c1_10, %c0_11] : memref<1x4x11x9x4xbf16, #tpu.memory_space<vmem>>, vector<1x1x10x8x4xbf16>
    %14 = vector.shape_cast %13 : vector<1x1x10x8x4xbf16> to vector<10x8x4xbf16>
    %15 = tpu.concatenate %6, %10, %14 in 2 : vector<10x8x4xbf16>, vector<10x8x4xbf16>, vector<10x8x4xbf16> -> vector<10x8x12xbf16>
    %16 = vector.shape_cast %15 : vector<10x8x12xbf16> to vector<80x12xbf16>
    %c0_12 = arith.constant 0 : index
    %c0_13 = arith.constant 0 : index
    %c0_14 = arith.constant 0 : index
    %17 = vector.load %arg3[%c0_12, %c0_13, %c0_14] : memref<3x12x8xbf16, #tpu.memory_space<vmem>>, vector<1x12x8xbf16>
    %18 = vector.shape_cast %17 : vector<1x12x8xbf16> to vector<12x8xbf16>
    %cst_15 = arith.constant dense<0.000000e+00> : vector<80x8xf32>
    %19 = tpu.matmul %16, %18, %cst_15 {dimension_numbers = #tpu.dot_dimension_numbers<[1], [0], [0], [1], [0, 0, 1, 1], [], []>} : vector<80x12xbf16>, vector<12x8xbf16>, vector<80x8xf32> -> vector<80x8xf32>
    %20 = arith.addf %2, %19 : vector<80x8xf32>
    %c0_i32_16 = arith.constant 0 : i32
    %21 = arith.addi %1, %c0_i32_16 : i32
    %c0_17 = arith.constant 0 : index
    %c2 = arith.constant 2 : index
    %22 = arith.index_cast %21 : i32 to index
    %c0_18 = arith.constant 0 : index
    %c0_19 = arith.constant 0 : index
    %23 = vector.load %arg2[%c0_17, %c2, %22, %c0_18, %c0_19] : memref<1x4x11x9x4xbf16, #tpu.memory_space<vmem>>, vector<1x1x10x8x4xbf16>
    %24 = vector.shape_cast %23 : vector<1x1x10x8x4xbf16> to vector<10x8x4xbf16>
    %c0_i32_20 = arith.constant 0 : i32
    %25 = arith.addi %1, %c0_i32_20 : i32
    %c0_21 = arith.constant 0 : index
    %c3 = arith.constant 3 : index
    %26 = arith.index_cast %25 : i32 to index
    %c0_22 = arith.constant 0 : index
    %c0_23 = arith.constant 0 : index
    %27 = vector.load %arg2[%c0_21, %c3, %26, %c0_22, %c0_23] : memref<1x4x11x9x4xbf16, #tpu.memory_space<vmem>>, vector<1x1x10x8x4xbf16>
    %28 = vector.shape_cast %27 : vector<1x1x10x8x4xbf16> to vector<10x8x4xbf16>
    %c0_i32_24 = arith.constant 0 : i32
    %29 = arith.addi %1, %c0_i32_24 : i32
    %c0_25 = arith.constant 0 : index
    %c2_26 = arith.constant 2 : index
    %30 = arith.index_cast %29 : i32 to index
    %c1_27 = arith.constant 1 : index
    %c0_28 = arith.constant 0 : index
    %31 = vector.load %arg2[%c0_25, %c2_26, %30, %c1_27, %c0_28] : memref<1x4x11x9x4xbf16, #tpu.memory_space<vmem>>, vector<1x1x10x8x4xbf16>
    %32 = vector.shape_cast %31 : vector<1x1x10x8x4xbf16> to vector<10x8x4xbf16>
    %33 = tpu.concatenate %24, %28, %32 in 2 : vector<10x8x4xbf16>, vector<10x8x4xbf16>, vector<10x8x4xbf16> -> vector<10x8x12xbf16>
    %34 = vector.shape_cast %33 : vector<10x8x12xbf16> to vector<80x12xbf16>
    %c1_29 = arith.constant 1 : index
    %c0_30 = arith.constant 0 : index
    %c0_31 = arith.constant 0 : index
    %35 = vector.load %arg3[%c1_29, %c0_30, %c0_31] : memref<3x12x8xbf16, #tpu.memory_space<vmem>>, vector<1x12x8xbf16>
    %36 = vector.shape_cast %35 : vector<1x12x8xbf16> to vector<12x8xbf16>
    %cst_32 = arith.constant dense<0.000000e+00> : vector<80x8xf32>
    %37 = tpu.matmul %34, %36, %cst_32 {dimension_numbers = #tpu.dot_dimension_numbers<[1], [0], [0], [1], [0, 0, 1, 1], [], []>} : vector<80x12xbf16>, vector<12x8xbf16>, vector<80x8xf32> -> vector<80x8xf32>
    %38 = arith.addf %20, %37 : vector<80x8xf32>
    %c1_i32 = arith.constant 1 : i32
    %39 = arith.addi %1, %c1_i32 : i32
    %c0_33 = arith.constant 0 : index
    %c0_34 = arith.constant 0 : index
    %40 = arith.index_cast %39 : i32 to index
    %c0_35 = arith.constant 0 : index
    %c0_36 = arith.constant 0 : index
    %41 = vector.load %arg2[%c0_33, %c0_34, %40, %c0_35, %c0_36] : memref<1x4x11x9x4xbf16, #tpu.memory_space<vmem>>, vector<1x1x10x8x4xbf16>
    %42 = vector.shape_cast %41 : vector<1x1x10x8x4xbf16> to vector<10x8x4xbf16>
    %c1_i32_37 = arith.constant 1 : i32
    %43 = arith.addi %1, %c1_i32_37 : i32
    %c0_38 = arith.constant 0 : index
    %c1_39 = arith.constant 1 : index
    %44 = arith.index_cast %43 : i32 to index
    %c0_40 = arith.constant 0 : index
    %c0_41 = arith.constant 0 : index
    %45 = vector.load %arg2[%c0_38, %c1_39, %44, %c0_40, %c0_41] : memref<1x4x11x9x4xbf16, #tpu.memory_space<vmem>>, vector<1x1x10x8x4xbf16>
    %46 = vector.shape_cast %45 : vector<1x1x10x8x4xbf16> to vector<10x8x4xbf16>
    %c1_i32_42 = arith.constant 1 : i32
    %47 = arith.addi %1, %c1_i32_42 : i32
    %c0_43 = arith.constant 0 : index
    %c0_44 = arith.constant 0 : index
    %48 = arith.index_cast %47 : i32 to index
    %c1_45 = arith.constant 1 : index
    %c0_46 = arith.constant 0 : index
    %49 = vector.load %arg2[%c0_43, %c0_44, %48, %c1_45, %c0_46] : memref<1x4x11x9x4xbf16, #tpu.memory_space<vmem>>, vector<1x1x10x8x4xbf16>
    %50 = vector.shape_cast %49 : vector<1x1x10x8x4xbf16> to vector<10x8x4xbf16>
    %51 = tpu.concatenate %42, %46, %50 in 2 : vector<10x8x4xbf16>, vector<10x8x4xbf16>, vector<10x8x4xbf16> -> vector<10x8x12xbf16>
    %52 = vector.shape_cast %51 : vector<10x8x12xbf16> to vector<80x12xbf16>
    %c2_47 = arith.constant 2 : index
    %c0_48 = arith.constant 0 : index
    %c0_49 = arith.constant 0 : index
    %53 = vector.load %arg3[%c2_47, %c0_48, %c0_49] : memref<3x12x8xbf16, #tpu.memory_space<vmem>>, vector<1x12x8xbf16>
    %54 = vector.shape_cast %53 : vector<1x12x8xbf16> to vector<12x8xbf16>
    %cst_50 = arith.constant dense<0.000000e+00> : vector<80x8xf32>
    %55 = tpu.matmul %52, %54, %cst_50 {dimension_numbers = #tpu.dot_dimension_numbers<[1], [0], [0], [1], [0, 0, 1, 1], [], []>} : vector<80x12xbf16>, vector<12x8xbf16>, vector<80x8xf32> -> vector<80x8xf32>
    %56 = arith.addf %38, %55 : vector<80x8xf32>
    %c0_51 = arith.constant 0 : index
    %c0_52 = arith.constant 0 : index
    %57 = vector.load %arg4[%c0_51, %c0_52] : memref<1x8xf32, #tpu.memory_space<vmem>>, vector<1x8xf32>
    %58 = vector.broadcast %57 : vector<1x8xf32> to vector<80x8xf32>
    %59 = arith.mulf %56, %58 : vector<80x8xf32>
    %c0_53 = arith.constant 0 : index
    %c0_54 = arith.constant 0 : index
    %60 = vector.load %arg5[%c0_53, %c0_54] : memref<1x8xf32, #tpu.memory_space<vmem>>, vector<1x8xf32>
    %61 = vector.broadcast %60 : vector<1x8xf32> to vector<80x8xf32>
    %62 = arith.addf %59, %61 : vector<80x8xf32>
    %cst_55 = arith.constant 0.000000e+00 : f32
    %63 = vector.broadcast %cst_55 : f32 to vector<80x8xf32>
    %64 = arith.maximumf %62, %63 : vector<80x8xf32>
    %65 = tpu.iota {dimensions = array<i32: 0>} : vector<10x1x1xi32>
    %c1_i32_56 = arith.constant 1 : i32
    %66 = arith.subi %1, %c1_i32_56 : i32
    %67 = vector.broadcast %66 : i32 to vector<10x1x1xi32>
    %68 = arith.addi %65, %67 : vector<10x1x1xi32>
    %69 = vector.shape_cast %64 : vector<80x8xf32> to vector<10x8x8xf32>
    %c0_i32_57 = arith.constant 0 : i32
    %70 = vector.broadcast %c0_i32_57 : i32 to vector<10x1x1xi32>
    %71 = arith.cmpi sge, %68, %70 : vector<10x1x1xi32>
    %c8_i32_58 = arith.constant 8 : i32
    %72 = vector.broadcast %c8_i32_58 : i32 to vector<10x1x1xi32>
    %73 = arith.cmpi slt, %68, %72 : vector<10x1x1xi32>
    %74 = arith.andi %71, %73 : vector<10x1x1xi1>
    %cst_59 = arith.constant 0.000000e+00 : f32
    %75 = vector.shape_cast %74 : vector<10x1x1xi1> to vector<10x1x1xi1>
    %76 = vector.broadcast %75 : vector<10x1x1xi1> to vector<10x8x8xi1>
    %77 = vector.broadcast %cst_59 : f32 to vector<10x8x8xf32>
    %78 = arith.select %76, %69, %77 : vector<10x8x8xi1>, vector<10x8x8xf32>
    %79 = arith.truncf %78 : vector<10x8x8xf32> to vector<10x8x8xbf16>
    %cst_60 = arith.constant 0.000000e+00 : bf16
    %80 = vector.broadcast %cst_60 : bf16 to vector<10x1x8xbf16>
    %c0_61 = arith.constant 0 : index
    %c0_62 = arith.constant 0 : index
    %c0_63 = arith.constant 0 : index
    %81 = vector.load %arg13[%c0_61, %c0_62, %c0_63] : memref<10x10x8xbf16, #tpu.memory_space<vmem>>, vector<10x1x8xbf16>
    tpu.vector_store %arg13[%c0_61, %c0_62, %c0_63], %80 {strides = array<i32>} : memref<10x10x8xbf16, #tpu.memory_space<vmem>>, vector<10x1x8xbf16>,
    %c0_64 = arith.constant 0 : index
    %c9 = arith.constant 9 : index
    %c0_65 = arith.constant 0 : index
    %82 = vector.load %arg13[%c0_64, %c9, %c0_65] : memref<10x10x8xbf16, #tpu.memory_space<vmem>>, vector<10x1x8xbf16>
    tpu.vector_store %arg13[%c0_64, %c9, %c0_65], %80 {strides = array<i32>} : memref<10x10x8xbf16, #tpu.memory_space<vmem>>, vector<10x1x8xbf16>,
    %c0_66 = arith.constant 0 : index
    %c1_67 = arith.constant 1 : index
    %c0_68 = arith.constant 0 : index
    %83 = vector.load %arg13[%c0_66, %c1_67, %c0_68] : memref<10x10x8xbf16, #tpu.memory_space<vmem>>, vector<10x8x8xbf16>
    tpu.vector_store %arg13[%c0_66, %c1_67, %c0_68], %79 {strides = array<i32>} : memref<10x10x8xbf16, #tpu.memory_space<vmem>>, vector<10x8x8xbf16>,
    %cst_69 = arith.constant 0.000000e+00 : f32
    %84 = vector.broadcast %cst_69 : f32 to vector<64x8xf32>
    %c0_70 = arith.constant 0 : index
    %c0_71 = arith.constant 0 : index
    %c0_72 = arith.constant 0 : index
    %85 = vector.load %arg13[%c0_70, %c0_71, %c0_72] : memref<10x10x8xbf16, #tpu.memory_space<vmem>>, vector<8x8x8xbf16>
    %c0_73 = arith.constant 0 : index
    %c1_74 = arith.constant 1 : index
    %c0_75 = arith.constant 0 : index
    %86 = vector.load %arg13[%c0_73, %c1_74, %c0_75] : memref<10x10x8xbf16, #tpu.memory_space<vmem>>, vector<8x8x8xbf16>
    %c0_76 = arith.constant 0 : index
    %c2_77 = arith.constant 2 : index
    %c0_78 = arith.constant 0 : index
    %87 = vector.load %arg13[%c0_76, %c2_77, %c0_78] : memref<10x10x8xbf16, #tpu.memory_space<vmem>>, vector<8x8x8xbf16>
    %88 = tpu.concatenate %85, %86, %87 in 2 : vector<8x8x8xbf16>, vector<8x8x8xbf16>, vector<8x8x8xbf16> -> vector<8x8x24xbf16>
    %89 = vector.shape_cast %88 : vector<8x8x24xbf16> to vector<64x24xbf16>
    %c0_79 = arith.constant 0 : index
    %c0_80 = arith.constant 0 : index
    %c0_81 = arith.constant 0 : index
    %90 = vector.load %arg6[%c0_79, %c0_80, %c0_81] : memref<3x24x8xbf16, #tpu.memory_space<vmem>>, vector<1x24x8xbf16>
    %91 = vector.shape_cast %90 : vector<1x24x8xbf16> to vector<24x8xbf16>
    %cst_82 = arith.constant dense<0.000000e+00> : vector<64x8xf32>
    %92 = tpu.matmul %89, %91, %cst_82 {dimension_numbers = #tpu.dot_dimension_numbers<[1], [0], [0], [1], [0, 0, 1, 1], [], []>} : vector<64x24xbf16>, vector<24x8xbf16>, vector<64x8xf32> -> vector<64x8xf32>
    %93 = arith.addf %84, %92 : vector<64x8xf32>
    %c1_83 = arith.constant 1 : index
    %c0_84 = arith.constant 0 : index
    %c0_85 = arith.constant 0 : index
    %94 = vector.load %arg13[%c1_83, %c0_84, %c0_85] : memref<10x10x8xbf16, #tpu.memory_space<vmem>>, vector<8x8x8xbf16>
    %c1_86 = arith.constant 1 : index
    %c1_87 = arith.constant 1 : index
    %c0_88 = arith.constant 0 : index
    %95 = vector.load %arg13[%c1_86, %c1_87, %c0_88] : memref<10x10x8xbf16, #tpu.memory_space<vmem>>, vector<8x8x8xbf16>
    %c1_89 = arith.constant 1 : index
    %c2_90 = arith.constant 2 : index
    %c0_91 = arith.constant 0 : index
    %96 = vector.load %arg13[%c1_89, %c2_90, %c0_91] : memref<10x10x8xbf16, #tpu.memory_space<vmem>>, vector<8x8x8xbf16>
    %97 = tpu.concatenate %94, %95, %96 in 2 : vector<8x8x8xbf16>, vector<8x8x8xbf16>, vector<8x8x8xbf16> -> vector<8x8x24xbf16>
    %98 = vector.shape_cast %97 : vector<8x8x24xbf16> to vector<64x24xbf16>
    %c1_92 = arith.constant 1 : index
    %c0_93 = arith.constant 0 : index
    %c0_94 = arith.constant 0 : index
    %99 = vector.load %arg6[%c1_92, %c0_93, %c0_94] : memref<3x24x8xbf16, #tpu.memory_space<vmem>>, vector<1x24x8xbf16>
    %100 = vector.shape_cast %99 : vector<1x24x8xbf16> to vector<24x8xbf16>
    %cst_95 = arith.constant dense<0.000000e+00> : vector<64x8xf32>
    %101 = tpu.matmul %98, %100, %cst_95 {dimension_numbers = #tpu.dot_dimension_numbers<[1], [0], [0], [1], [0, 0, 1, 1], [], []>} : vector<64x24xbf16>, vector<24x8xbf16>, vector<64x8xf32> -> vector<64x8xf32>
    %102 = arith.addf %93, %101 : vector<64x8xf32>
    %c2_96 = arith.constant 2 : index
    %c0_97 = arith.constant 0 : index
    %c0_98 = arith.constant 0 : index
    %103 = vector.load %arg13[%c2_96, %c0_97, %c0_98] : memref<10x10x8xbf16, #tpu.memory_space<vmem>>, vector<8x8x8xbf16>
    %c2_99 = arith.constant 2 : index
    %c1_100 = arith.constant 1 : index
    %c0_101 = arith.constant 0 : index
    %104 = vector.load %arg13[%c2_99, %c1_100, %c0_101] : memref<10x10x8xbf16, #tpu.memory_space<vmem>>, vector<8x8x8xbf16>
    %c2_102 = arith.constant 2 : index
    %c2_103 = arith.constant 2 : index
    %c0_104 = arith.constant 0 : index
    %105 = vector.load %arg13[%c2_102, %c2_103, %c0_104] : memref<10x10x8xbf16, #tpu.memory_space<vmem>>, vector<8x8x8xbf16>
    %106 = tpu.concatenate %103, %104, %105 in 2 : vector<8x8x8xbf16>, vector<8x8x8xbf16>, vector<8x8x8xbf16> -> vector<8x8x24xbf16>
    %107 = vector.shape_cast %106 : vector<8x8x24xbf16> to vector<64x24xbf16>
    %c2_105 = arith.constant 2 : index
    %c0_106 = arith.constant 0 : index
    %c0_107 = arith.constant 0 : index
    %108 = vector.load %arg6[%c2_105, %c0_106, %c0_107] : memref<3x24x8xbf16, #tpu.memory_space<vmem>>, vector<1x24x8xbf16>
    %109 = vector.shape_cast %108 : vector<1x24x8xbf16> to vector<24x8xbf16>
    %cst_108 = arith.constant dense<0.000000e+00> : vector<64x8xf32>
    %110 = tpu.matmul %107, %109, %cst_108 {dimension_numbers = #tpu.dot_dimension_numbers<[1], [0], [0], [1], [0, 0, 1, 1], [], []>} : vector<64x24xbf16>, vector<24x8xbf16>, vector<64x8xf32> -> vector<64x8xf32>
    %111 = arith.addf %102, %110 : vector<64x8xf32>
    %c0_109 = arith.constant 0 : index
    %c0_110 = arith.constant 0 : index
    %112 = vector.load %arg7[%c0_109, %c0_110] : memref<1x8xf32, #tpu.memory_space<vmem>>, vector<1x8xf32>
    %113 = vector.broadcast %112 : vector<1x8xf32> to vector<64x8xf32>
    %114 = arith.mulf %111, %113 : vector<64x8xf32>
    %c0_111 = arith.constant 0 : index
    %c0_112 = arith.constant 0 : index
    %115 = vector.load %arg8[%c0_111, %c0_112] : memref<1x8xf32, #tpu.memory_space<vmem>>, vector<1x8xf32>
    %116 = vector.broadcast %115 : vector<1x8xf32> to vector<64x8xf32>
    %117 = arith.addf %114, %116 : vector<64x8xf32>
    %c1_i32_113 = arith.constant 1 : i32
    %118 = arith.addi %1, %c1_i32_113 : i32
    %c0_i32_114 = arith.constant 0 : i32
    %119 = arith.addi %118, %c0_i32_114 : i32
    %c0_115 = arith.constant 0 : index
    %c3_116 = arith.constant 3 : index
    %120 = arith.index_cast %119 : i32 to index
    %c0_117 = arith.constant 0 : index
    %c0_118 = arith.constant 0 : index
    %121 = vector.load %arg2[%c0_115, %c3_116, %120, %c0_117, %c0_118] : memref<1x4x11x9x4xbf16, #tpu.memory_space<vmem>>, vector<1x1x8x8x4xbf16>
    %122 = vector.shape_cast %121 : vector<1x1x8x8x4xbf16> to vector<8x8x4xbf16>
    %123 = vector.shape_cast %122 : vector<8x8x4xbf16> to vector<64x4xbf16>
    %c0_119 = arith.constant 0 : index
    %c0_120 = arith.constant 0 : index
    %124 = vector.load %arg9[%c0_119, %c0_120] : memref<4x8xbf16, #tpu.memory_space<vmem>>, vector<4x8xbf16>
    %cst_121 = arith.constant dense<0.000000e+00> : vector<64x8xf32>
    %125 = tpu.matmul %123, %124, %cst_121 {dimension_numbers = #tpu.dot_dimension_numbers<[1], [0], [0], [1], [0, 0, 1, 1], [], []>} : vector<64x4xbf16>, vector<4x8xbf16>, vector<64x8xf32> -> vector<64x8xf32>
    %c0_122 = arith.constant 0 : index
    %c0_123 = arith.constant 0 : index
    %126 = vector.load %arg10[%c0_122, %c0_123] : memref<1x8xf32, #tpu.memory_space<vmem>>, vector<1x8xf32>
    %127 = vector.broadcast %126 : vector<1x8xf32> to vector<64x8xf32>
    %128 = arith.mulf %125, %127 : vector<64x8xf32>
    %c0_124 = arith.constant 0 : index
    %c0_125 = arith.constant 0 : index
    %129 = vector.load %arg11[%c0_124, %c0_125] : memref<1x8xf32, #tpu.memory_space<vmem>>, vector<1x8xf32>
    %130 = vector.broadcast %129 : vector<1x8xf32> to vector<64x8xf32>
    %131 = arith.addf %128, %130 : vector<64x8xf32>
    %132 = arith.addf %117, %131 : vector<64x8xf32>
    %cst_126 = arith.constant 0.000000e+00 : f32
    %133 = vector.broadcast %cst_126 : f32 to vector<64x8xf32>
    %134 = arith.maximumf %132, %133 : vector<64x8xf32>
    %135 = arith.truncf %134 : vector<64x8xf32> to vector<64x8xbf16>
    %c0_127 = arith.constant 0 : index
    %c0_128 = arith.constant 0 : index
    %c0_129 = arith.constant 0 : index
    %136 = vector.load %arg12[%c0_127, %c0_128, %c0_129] : memref<1x64x8xbf16, #tpu.memory_space<vmem>>, vector<1x64x8xbf16>
    %137 = vector.shape_cast %136 : vector<1x64x8xbf16> to vector<64x8xbf16>
    %138 = vector.shape_cast %135 : vector<64x8xbf16> to vector<1x64x8xbf16>
    tpu.vector_store %arg12[%c0_127, %c0_128, %c0_129], %138 {strides = array<i32>} : memref<1x64x8xbf16, #tpu.memory_space<vmem>>, vector<1x64x8xbf16>,
    return
  }
  func.func @transform_0(%arg0: i32, %arg1: i32) -> (i32, i32, i32, i32, i32) {
    %c0_i32 = arith.constant 0 : i32
    %c0_i32_0 = arith.constant 0 : i32
    %c0_i32_1 = arith.constant 0 : i32
    %c0_i32_2 = arith.constant 0 : i32
    %c0_i32_3 = arith.constant 0 : i32
    return %arg0, %c0_i32, %c0_i32_0, %c0_i32_1, %c0_i32_2 : i32, i32, i32, i32, i32
  }
  func.func @transform_1(%arg0: i32, %arg1: i32) -> (i32, i32, i32) {
    %c0_i32 = arith.constant 0 : i32
    %c0_i32_0 = arith.constant 0 : i32
    %c0_i32_1 = arith.constant 0 : i32
    %c0_i32_2 = arith.constant 0 : i32
    return %c0_i32, %c0_i32_0, %c0_i32_1 : i32, i32, i32
  }
  func.func @transform_2(%arg0: i32, %arg1: i32) -> (i32, i32) {
    %c0_i32 = arith.constant 0 : i32
    %c0_i32_0 = arith.constant 0 : i32
    %c0_i32_1 = arith.constant 0 : i32
    return %c0_i32, %c0_i32_0 : i32, i32
  }
  func.func @transform_3(%arg0: i32, %arg1: i32) -> (i32, i32) {
    %c0_i32 = arith.constant 0 : i32
    %c0_i32_0 = arith.constant 0 : i32
    %c0_i32_1 = arith.constant 0 : i32
    return %c0_i32, %c0_i32_0 : i32, i32
  }
  func.func @transform_4(%arg0: i32, %arg1: i32) -> (i32, i32, i32) {
    %c0_i32 = arith.constant 0 : i32
    %c0_i32_0 = arith.constant 0 : i32
    %c0_i32_1 = arith.constant 0 : i32
    %c0_i32_2 = arith.constant 0 : i32
    return %c0_i32, %c0_i32_0, %c0_i32_1 : i32, i32, i32
  }
  func.func @transform_5(%arg0: i32, %arg1: i32) -> (i32, i32) {
    %c0_i32 = arith.constant 0 : i32
    %c0_i32_0 = arith.constant 0 : i32
    %c0_i32_1 = arith.constant 0 : i32
    return %c0_i32, %c0_i32_0 : i32, i32
  }
  func.func @transform_6(%arg0: i32, %arg1: i32) -> (i32, i32) {
    %c0_i32 = arith.constant 0 : i32
    %c0_i32_0 = arith.constant 0 : i32
    %c0_i32_1 = arith.constant 0 : i32
    return %c0_i32, %c0_i32_0 : i32, i32
  }
  func.func @transform_7(%arg0: i32, %arg1: i32) -> (i32, i32) {
    %c0_i32 = arith.constant 0 : i32
    %c0_i32_0 = arith.constant 0 : i32
    %c0_i32_1 = arith.constant 0 : i32
    return %c0_i32, %c0_i32_0 : i32, i32
  }
  func.func @transform_8(%arg0: i32, %arg1: i32) -> (i32, i32) {
    %c0_i32 = arith.constant 0 : i32
    %c0_i32_0 = arith.constant 0 : i32
    %c0_i32_1 = arith.constant 0 : i32
    return %c0_i32, %c0_i32_0 : i32, i32
  }
  func.func @transform_9(%arg0: i32, %arg1: i32) -> (i32, i32) {
    %c0_i32 = arith.constant 0 : i32
    %c0_i32_0 = arith.constant 0 : i32
    %c0_i32_1 = arith.constant 0 : i32
    return %c0_i32, %c0_i32_0 : i32, i32
  }
  func.func @transform_10(%arg0: i32, %arg1: i32) -> (i32, i32, i32) {
    %c0_i32 = arith.constant 0 : i32
    %c0_i32_0 = arith.constant 0 : i32
    return %arg0, %arg1, %c0_i32 : i32, i32, i32
  }
}

</mosaic_0001>

<llo_original>
// kernel: resblk_forward.1
$region0: #{resblk_forward.1}
  #allocation0 [shape = 'u32[]', space=smem, size = 0x4, offset = 0x4, fixed_abs, tag = 'smem constant byte address 0x4 - core index']
  #allocation1 [shape = 'u32[72,128]{1,0:T(1,128)}', space=vmem, size = 0x9000, scoped, tag = 'internal scratch']
  #allocation2 [shape = 'bf16[10,10,8]{2,1,0:T(8,128)(2,1)}', space=vmem, size = 0xa000, scoped, tag = 'scratch operand']
  %s0 = inlined_call_operand.vmem [shape: bf16[2,4,11,9,4], index: 0, kind: input, shape index: {}]
  %s1 = inlined_call_operand.vmem [shape: bf16[3,12,8], index: 1, kind: input, shape index: {}]
  %s2 = inlined_call_operand.vmem [shape: f32[1,8], index: 2, kind: input, shape index: {}]
  %s3 = inlined_call_operand.vmem [shape: f32[1,8], index: 3, kind: input, shape index: {}]
  %s4 = inlined_call_operand.vmem [shape: bf16[3,24,8], index: 4, kind: input, shape index: {}]
  %s5 = inlined_call_operand.vmem [shape: f32[1,8], index: 5, kind: input, shape index: {}]
  %s6 = inlined_call_operand.vmem [shape: f32[1,8], index: 6, kind: input, shape index: {}]
  %s7 = inlined_call_operand.vmem [shape: bf16[4,8], index: 7, kind: input, shape index: {}]
  %s8 = inlined_call_operand.vmem [shape: f32[1,8], index: 8, kind: input, shape index: {}]
  %s9 = inlined_call_operand.vmem [shape: f32[1,8], index: 9, kind: input, shape index: {}]
  %s10 = inlined_call_operand.hbm [shape: bf16[2,64,8], index: 10, kind: output, shape index: {}]
  %s11 = sld [smem:[#allocation0]]
  $region73: #{resblk_forward.1} parent=0
    _
  %s13 = ssub.s32 1, %s11
  %s14 = scalar_select 0, %s13, %s11
  $region1: #{resblk_forward.1} parent=0
    #allocation3 [shape = 'u8[32768]{0}', space=vmem, size = 0x8000, scoped, tag = 'output window, operand 0']
    #allocation4 [shape = 's32[2]{0}', space=sflag, size = 0x8, scoped, tag = 'scoped memory for resblk_forward.1']
    %15 = vsyncpa [#allocation4], 0
    %s16 = scalar_lea.sflag [#allocation4], 1
    %17 = vsyncpa %s16, 0
    loop: start=0, step=1, limit=4
    $region2: #{resblk_forward.1} parent=1 // loop_pre_header
      _
    $region3: #{resblk_forward.1} parent=1 // loop_header
      %s19 = sphi 0, %s23
      %p20 = scmp.ge.s32.totalorder %s19, 4
      %s26 = sphi 0, %s38
      %s27 = sphi 0, %s34
      %s28 = sphi 0, %s26
      %s29 = sphi 0, %s27
      %s30 = sphi 0, %s28
      %s31 = sphi 0, %s29
      %s41 = sphi 0, %s43
      %s44 = sphi 0, %s41
      %s45 = sphi 0, %s44
      %s61 = sphi 0, %s45
      %s65 = sphi 0, %s65
      %s67 = sphi 0, %s65
      %s68 = sphi 0, %s67
      %s82 = sphi 0, %s68
      %s86 = sphi 0, %s86
      %s88 = sphi 0, %s86
      %s89 = sphi 0, %s88
      %s103 = sphi 0, %s89
      %s107 = sphi 0, %s107
      %s109 = sphi 0, %s107
      %s110 = sphi 0, %s109
      %s124 = sphi 0, %s110
      %s128 = sphi 0, %s128
      %s130 = sphi 0, %s128
      %s131 = sphi 0, %s130
      %s145 = sphi 0, %s131
      %s149 = sphi 0, %s149
      %s151 = sphi 0, %s149
      %s152 = sphi 0, %s151
      %s166 = sphi 0, %s152
      %s170 = sphi 0, %s170
      %s172 = sphi 0, %s170
      %s173 = sphi 0, %s172
      %s187 = sphi 0, %s173
      %s191 = sphi 0, %s191
      %s193 = sphi 0, %s191
      %s194 = sphi 0, %s193
      %s208 = sphi 0, %s194
      %s212 = sphi 0, %s212
      %s214 = sphi 0, %s212
      %s215 = sphi 0, %s214
      %s229 = sphi 0, %s215
      %s233 = sphi 0, %s233
      %s235 = sphi 0, %s233
      %s236 = sphi 0, %s235
      %s250 = sphi 0, %s236
      %s258 = sphi 0, %s260
      %s261 = sphi 0, %s258
      %s262 = sphi 0, %s261
      %s278 = sphi 0, %s262
    $region4: #{resblk_forward.1} parent=1 // loop_header_branch
      %22 = sbr.rel (%p20) target = $region8
    $region5: #{resblk_forward.1} parent=1 // loop_body
      %s24 = ssub.s32 %s19, 1
      %s25 = ssub.s32 %s19, 2
      %s32 = sadd.s32 1, %s27
      %p33 = scmp.ge.s32.totalorder %s32, 1
      %s34 = scalar_select %p33, 0, %s32
      %s35 = sadd.s32 1, %s26
      %s36 = scalar_select %p33, %s35, %s26
      %p37 = scmp.ge.s32.totalorder %s36, 2
      %s38 = scalar_select %p37, 0, %s36
      %s39 = ssub.s32 %s26, %s38
      %p40 = scmp.eq.s32.totalorder %s39, 0
      %s42 = sadd.s32 %s41, 1
      %s43 = scalar_select %p40, %s41, %s42
      %p46 = pneg %p40
      %p47 = scmp.eq.s32.totalorder %s19, 1
      %p48 = por %p46, %p47
      %p49 = scmp.ne.s32.totalorder %s41, %s44
      %p50 = scmp.eq.s32.totalorder %s19, 0
      %p51 = por %p49, %p50
      %p52 = scmp.ne.s32.totalorder %s41, %s44
      %p53 = scmp.eq.s32.totalorder %s24, 1
      %p54 = por %p52, %p53
      %p55 = scmp.ne.s32.totalorder %s44, %s45
      %p56 = scmp.eq.s32.totalorder %s24, 0
      %p57 = por %p55, %p56
      %p58 = scmp.ne.s32.totalorder %s44, %s45
      %p59 = scmp.eq.s32.totalorder %s25, 1
      %p60 = por %p58, %p59
      %p62 = scmp.ne.s32.totalorder %s45, %s61
      %p63 = scmp.eq.s32.totalorder %s25, 0
      %p64 = por %p62, %p63
      %s66 = sadd.s32 %s65, 1
      %p69 = scmp.eq.s32.totalorder %s19, 1
      %p70 = scmp.ne.s32.totalorder %s65, %s67
      %p71 = scmp.eq.s32.totalorder %s19, 0
      %p72 = por %p70, %p71
      %p73 = scmp.ne.s32.totalorder %s65, %s67
      %p74 = scmp.eq.s32.totalorder %s24, 1
      %p75 = por %p73, %p74
      %p76 = scmp.ne.s32.totalorder %s67, %s68
      %p77 = scmp.eq.s32.totalorder %s24, 0
      %p78 = por %p76, %p77
      %p79 = scmp.ne.s32.totalorder %s67, %s68
      %p80 = scmp.eq.s32.totalorder %s25, 1
      %p81 = por %p79, %p80
      %p83 = scmp.ne.s32.totalorder %s68, %s82
      %p84 = scmp.eq.s32.totalorder %s25, 0
      %p85 = por %p83, %p84
      %s87 = sadd.s32 %s86, 1
      %p90 = scmp.eq.s32.totalorder %s19, 1
      %p91 = scmp.ne.s32.totalorder %s86, %s88
      %p92 = scmp.eq.s32.totalorder %s19, 0
      %p93 = por %p91, %p92
      %p94 = scmp.ne.s32.totalorder %s86, %s88
      %p95 = scmp.eq.s32.totalorder %s24, 1
      %p96 = por %p94, %p95
      %p97 = scmp.ne.s32.totalorder %s88, %s89
      %p98 = scmp.eq.s32.totalorder %s24, 0
      %p99 = por %p97, %p98
      %p100 = scmp.ne.s32.totalorder %s88, %s89
      %p101 = scmp.eq.s32.totalorder %s25, 1
      %p102 = por %p100, %p101
      %p104 = scmp.ne.s32.totalorder %s89, %s103
      %p105 = scmp.eq.s32.totalorder %s25, 0
      %p106 = por %p104, %p105
      %s108 = sadd.s32 %s107, 1
      %p111 = scmp.eq.s32.totalorder %s19, 1
      %p112 = scmp.ne.s32.totalorder %s107, %s109
      %p113 = scmp.eq.s32.totalorder %s19, 0
      %p114 = por %p112, %p113
      %p115 = scmp.ne.s32.totalorder %s107, %s109
      %p116 = scmp.eq.s32.totalorder %s24, 1
      %p117 = por %p115, %p116
      %p118 = scmp.ne.s32.totalorder %s109, %s110
      %p119 = scmp.eq.s32.totalorder %s24, 0
      %p120 = por %p118, %p119
      %p121 = scmp.ne.s32.totalorder %s109, %s110
      %p122 = scmp.eq.s32.totalorder %s25, 1
      %p123 = por %p121, %p122
      %p125 = scmp.ne.s32.totalorder %s110, %s124
      %p126 = scmp.eq.s32.totalorder %s25, 0
      %p127 = por %p125, %p126
      %s129 = sadd.s32 %s128, 1
      %p132 = scmp.eq.s32.totalorder %s19, 1
      %p133 = scmp.ne.s32.totalorder %s128, %s130
      %p134 = scmp.eq.s32.totalorder %s19, 0
      %p135 = por %p133, %p134
      %p136 = scmp.ne.s32.totalorder %s128, %s130
      %p137 = scmp.eq.s32.totalorder %s24, 1
      %p138 = por %p136, %p137
      %p139 = scmp.ne.s32.totalorder %s130, %s131
      %p140 = scmp.eq.s32.totalorder %s24, 0
      %p141 = por %p139, %p140
      %p142 = scmp.ne.s32.totalorder %s130, %s131
      %p143 = scmp.eq.s32.totalorder %s25, 1
      %p144 = por %p142, %p143
      %p146 = scmp.ne.s32.totalorder %s131, %s145
      %p147 = scmp.eq.s32.totalorder %s25, 0
      %p148 = por %p146, %p147
      %s150 = sadd.s32 %s149, 1
      %p153 = scmp.eq.s32.totalorder %s19, 1
      %p154 = scmp.ne.s32.totalorder %s149, %s151
      %p155 = scmp.eq.s32.totalorder %s19, 0
      %p156 = por %p154, %p155
      %p157 = scmp.ne.s32.totalorder %s149, %s151
      %p158 = scmp.eq.s32.totalorder %s24, 1
      %p159 = por %p157, %p158
      %p160 = scmp.ne.s32.totalorder %s151, %s152
      %p161 = scmp.eq.s32.totalorder %s24, 0
      %p162 = por %p160, %p161
      %p163 = scmp.ne.s32.totalorder %s151, %s152
      %p164 = scmp.eq.s32.totalorder %s25, 1
      %p165 = por %p163, %p164
      %p167 = scmp.ne.s32.totalorder %s152, %s166
      %p168 = scmp.eq.s32.totalorder %s25, 0
      %p169 = por %p167, %p168
      %s171 = sadd.s32 %s170, 1
      %p174 = scmp.eq.s32.totalorder %s19, 1
      %p175 = scmp.ne.s32.totalorder %s170, %s172
      %p176 = scmp.eq.s32.totalorder %s19, 0
      %p177 = por %p175, %p176
      %p178 = scmp.ne.s32.totalorder %s170, %s172
      %p179 = scmp.eq.s32.totalorder %s24, 1
      %p180 = por %p178, %p179
      %p181 = scmp.ne.s32.totalorder %s172, %s173
      %p182 = scmp.eq.s32.totalorder %s24, 0
      %p183 = por %p181, %p182
      %p184 = scmp.ne.s32.totalorder %s172, %s173
      %p185 = scmp.eq.s32.totalorder %s25, 1
      %p186 = por %p184, %p185
      %p188 = scmp.ne.s32.totalorder %s173, %s187
      %p189 = scmp.eq.s32.totalorder %s25, 0
      %p190 = por %p188, %p189
      %s192 = sadd.s32 %s191, 1
      %p195 = scmp.eq.s32.totalorder %s19, 1
      %p196 = scmp.ne.s32.totalorder %s191, %s193
      %p197 = scmp.eq.s32.totalorder %s19, 0
      %p198 = por %p196, %p197
      %p199 = scmp.ne.s32.totalorder %s191, %s193
      %p200 = scmp.eq.s32.totalorder %s24, 1
      %p201 = por %p199, %p200
      %p202 = scmp.ne.s32.totalorder %s193, %s194
      %p203 = scmp.eq.s32.totalorder %s24, 0
      %p204 = por %p202, %p203
      %p205 = scmp.ne.s32.totalorder %s193, %s194
      %p206 = scmp.eq.s32.totalorder %s25, 1
      %p207 = por %p205, %p206
      %p209 = scmp.ne.s32.totalorder %s194, %s208
      %p210 = scmp.eq.s32.totalorder %s25, 0
      %p211 = por %p209, %p210
      %s213 = sadd.s32 %s212, 1
      %p216 = scmp.eq.s32.totalorder %s19, 1
      %p217 = scmp.ne.s32.totalorder %s212, %s214
      %p218 = scmp.eq.s32.totalorder %s19, 0
      %p219 = por %p217, %p218
      %p220 = scmp.ne.s32.totalorder %s212, %s214
      %p221 = scmp.eq.s32.totalorder %s24, 1
      %p222 = por %p220, %p221
      %p223 = scmp.ne.s32.totalorder %s214, %s215
      %p224 = scmp.eq.s32.totalorder %s24, 0
      %p225 = por %p223, %p224
      %p226 = scmp.ne.s32.totalorder %s214, %s215
      %p227 = scmp.eq.s32.totalorder %s25, 1
      %p228 = por %p226, %p227
      %p230 = scmp.ne.s32.totalorder %s215, %s229
      %p231 = scmp.eq.s32.totalorder %s25, 0
      %p232 = por %p230, %p231
      %s234 = sadd.s32 %s233, 1
      %p237 = scmp.eq.s32.totalorder %s19, 1
      %p238 = scmp.ne.s32.totalorder %s233, %s235
      %p239 = scmp.eq.s32.totalorder %s19, 0
      %p240 = por %p238, %p239
      %p241 = scmp.ne.s32.totalorder %s233, %s235
      %p242 = scmp.eq.s32.totalorder %s24, 1
      %p243 = por %p241, %p242
      %p244 = scmp.ne.s32.totalorder %s235, %s236
      %p245 = scmp.eq.s32.totalorder %s24, 0
      %p246 = por %p244, %p245
      %p247 = scmp.ne.s32.totalorder %s235, %s236
      %p248 = scmp.eq.s32.totalorder %s25, 1
      %p249 = por %p247, %p248
      %p251 = scmp.ne.s32.totalorder %s236, %s250
      %p252 = scmp.eq.s32.totalorder %s25, 0
      %p253 = por %p251, %p252
      %s254 = ssub.s32 %s26, %s38
      %s255 = ssub.s32 %s27, %s34
      %s256 = sor.u32 %s254, %s255
      %p257 = scmp.eq.s32.totalorder %s256, 0
      %s259 = sadd.s32 %s258, 1
      %s260 = scalar_select %p257, %s258, %s259
      %p263 = pneg %p257
      %p264 = scmp.eq.s32.totalorder %s19, 1
      %p265 = por %p263, %p264
      %p266 = scmp.ne.s32.totalorder %s258, %s261
      %p267 = scmp.eq.s32.totalorder %s19, 0
      %p268 = por %p266, %p267
      %p269 = scmp.ne.s32.totalorder %s258, %s261
      %p270 = scmp.eq.s32.totalorder %s24, 1
      %p271 = por %p269, %p270
      %p272 = scmp.ne.s32.totalorder %s261, %s262
      %p273 = scmp.eq.s32.totalorder %s24, 0
      %p274 = por %p272, %p273
      %p275 = scmp.ne.s32.totalorder %s261, %s262
      %p276 = scmp.eq.s32.totalorder %s25, 1
      %p277 = por %p275, %p276
      %p279 = scmp.ne.s32.totalorder %s262, %s278
      %p280 = scmp.eq.s32.totalorder %s25, 0
      %p281 = por %p279, %p280
      %p282 = scmp.le.s32.totalorder 1, %s19
      %p283 = scmp.lt.s32.totalorder %s19, 3
      %p284 = pnand %p282, %p283
      %p285 = pneg %p284
      // Predicated region
      $region9: #{resblk_forward.1} parent=5 // pred_check
        _
      $region10: #{resblk_forward.1} parent=5 // pred_check_branch
        %287 = sbr.rel (%p284) target = $region12
      $region11: #{resblk_forward.1} parent=5 // pred_region
        %s288 = ssub.s32 %s19, 1
        // Predicated region
        $region13: #{resblk_forward.1} parent=11 // pred_check
          %p289 = pneg %p78
        $region14: #{resblk_forward.1} parent=11 // pred_check_branch
          %291 = sbr.rel (%p289) target = $region16
        $region15: #{resblk_forward.1} parent=11 // pred_region
          _
        $region16: #{resblk_forward.1} parent=11 // pred_fallthru
          _
        // Predicated region
        $region17: #{resblk_forward.1} parent=11 // pred_check
          %p292 = pneg %p99
        $region18: #{resblk_forward.1} parent=11 // pred_check_branch
          %294 = sbr.rel (%p292) target = $region20
        $region19: #{resblk_forward.1} parent=11 // pred_region
          _
        $region20: #{resblk_forward.1} parent=11 // pred_fallthru
          _
        // Predicated region
        $region21: #{resblk_forward.1} parent=11 // pred_check
          %p295 = pneg %p120
        $region22: #{resblk_forward.1} parent=11 // pred_check_branch
          %297 = sbr.rel (%p295) target = $region24
        $region23: #{resblk_forward.1} parent=11 // pred_region
          _
        $region24: #{resblk_forward.1} parent=11 // pred_fallthru
          _
        // Predicated region
        $region25: #{resblk_forward.1} parent=11 // pred_check
          %p298 = pneg %p141
        $region26: #{resblk_forward.1} parent=11 // pred_check_branch
          %300 = sbr.rel (%p298) target = $region28
        $region27: #{resblk_forward.1} parent=11 // pred_region
          _
        $region28: #{resblk_forward.1} parent=11 // pred_fallthru
          _
        // Predicated region
        $region29: #{resblk_forward.1} parent=11 // pred_check
          %p301 = pneg %p162
        $region30: #{resblk_forward.1} parent=11 // pred_check_branch
          %303 = sbr.rel (%p301) target = $region32
        $region31: #{resblk_forward.1} parent=11 // pred_region
          _
        $region32: #{resblk_forward.1} parent=11 // pred_fallthru
          _
        // Predicated region
        $region33: #{resblk_forward.1} parent=11 // pred_check
          %p304 = pneg %p183
        $region34: #{resblk_forward.1} parent=11 // pred_check_branch
          %306 = sbr.rel (%p304) target = $region36
        $region35: #{resblk_forward.1} parent=11 // pred_region
          _
        $region36: #{resblk_forward.1} parent=11 // pred_fallthru
          _
        // Predicated region
        $region37: #{resblk_forward.1} parent=11 // pred_check
          %p307 = pneg %p204
        $region38: #{resblk_forward.1} parent=11 // pred_check_branch
          %309 = sbr.rel (%p307) target = $region40
        $region39: #{resblk_forward.1} parent=11 // pred_region
          _
        $region40: #{resblk_forward.1} parent=11 // pred_fallthru
          _
        // Predicated region
        $region41: #{resblk_forward.1} parent=11 // pred_check
          %p310 = pneg %p225
        $region42: #{resblk_forward.1} parent=11 // pred_check_branch
          %312 = sbr.rel (%p310) target = $region44
        $region43: #{resblk_forward.1} parent=11 // pred_region
          _
        $region44: #{resblk_forward.1} parent=11 // pred_fallthru
          _
        // Predicated region
        $region45: #{resblk_forward.1} parent=11 // pred_check
          %p313 = pneg %p246
        $region46: #{resblk_forward.1} parent=11 // pred_check_branch
          %315 = sbr.rel (%p313) target = $region48
        $region47: #{resblk_forward.1} parent=11 // pred_region
          _
        $region48: #{resblk_forward.1} parent=11 // pred_fallthru
          _
      $region12: #{resblk_forward.1} parent=5 // pred_fallthru
        _
      %p316 = scmp.lt.s32.totalorder %s19, 2
      // Predicated region
      $region49: #{resblk_forward.1} parent=5 // pred_check
        %p317 = pneg %p316
      $region50: #{resblk_forward.1} parent=5 // pred_check_branch
        %319 = sbr.rel (%p317) target = $region52
      $region51: #{resblk_forward.1} parent=5 // pred_region
        // Predicated region
        $region53: #{resblk_forward.1} parent=51 // pred_check
          %p320 = pneg %p51
        $region54: #{resblk_forward.1} parent=51 // pred_check_branch
          %322 = sbr.rel (%p320) target = $region56
        $region55: #{resblk_forward.1} parent=51 // pred_region
          %p323 = scmp.lt.s32.totalorder %s26, 1
          %s324 = scalar_select %p323, %s26, 1
          %s325 = smul.addr %s324, 88
          %s326 = smul.addr %s325, 4
          %s327 = scalar_lea.vmem %s0, %s326
        $region56: #{resblk_forward.1} parent=51 // pred_fallthru
          _
      $region52: #{resblk_forward.1} parent=5 // pred_fallthru
        _
      %p328 = scmp.le.s32.totalorder 1, %s19
      %p329 = scmp.lt.s32.totalorder %s19, 3
      %p330 = pnand %p328, %p329
      %p331 = pneg %p330
      // Predicated region
      $region57: #{resblk_forward.1} parent=5 // pred_check
        _
      $region58: #{resblk_forward.1} parent=5 // pred_check_branch
        %333 = sbr.rel (%p330) target = $region60
      $region59: #{resblk_forward.1} parent=5 // pred_region
        %s334 = ssub.s32 %s19, 1
        %p335 = scmp.lt.s32.totalorder %s28, 1
        %s336 = scalar_select %p335, %s28, 1
        %s337 = smul.addr %s336, 88
        %s338 = smul.addr %s337, 4
        %s339 = scalar_lea.vmem %s0, %s338
        %p340 = pneg %p57
        %p341 = pneg %p54
        %p342 = pneg %p78
        %p343 = pneg %p75
        %p344 = pneg %p99
        %p345 = pneg %p96
        %p346 = pneg %p120
        %p347 = pneg %p117
        %p348 = pneg %p141
        %p349 = pneg %p138
        %p350 = pneg %p162
        %p351 = pneg %p159
        %p352 = pneg %p183
        %p353 = pneg %p180
        %p354 = pneg %p204
        %p355 = pneg %p201
        %p356 = pneg %p225
        %p357 = pneg %p222
        %p358 = pneg %p246
        %p359 = pneg %p243
        %p360 = pneg %p274
        %p361 = pneg %p271
        %s362 = sand.u32 %s261, 1
        %s363 = scalar_lea.sflag [#allocation4], %s362
        %s364 = sand.u32 %s261, 1
        %s365 = smul.addr %s364, 32
        %s366 = scalar_lea.vmem [#allocation3], %s365
        %p367 = scmp.lt.s32.totalorder %s28, 1
        %s368 = scalar_select %p367, %s28, 1
        %s369 = smul.addr %s368, 88
        %s370 = smul.addr %s369, 4
        %s371 = scalar_lea.vmem %s0, %s370
        %s372 = smul.u32 8, %s29
        %s374 = smul.u32 %s29, 8
        %s375 = smul.u32 %s374, 2
        %s376 = smul.addr %s375, 4
        %s377 = scalar_lea.vmem %s371, %s376
        %v378 = vld [vmem:[%s377] sm:$0xf]
        %v379 = vld [vmem:[%s377 + $0x8] sm:$0xf]
        %v380 = vld [vmem:[%s377 + $0x10] sm:$0xf]
        %v381 = vld [vmem:[%s377 + $0x18] sm:$0xf]
        %v382 = vld [vmem:[%s377 + $0x20] sm:$0xf]
        %v383 = vld [vmem:[%s377 + $0x28] sm:$0xf]
        %v384 = vld [vmem:[%s377 + $0x30] sm:$0xf]
        %v385 = vld [vmem:[%s377 + $0x38] sm:$0xf]
        %v386 = vld [vmem:[%s377 + $0x40] sm:$0xf]
        %v387 = vld [vmem:[%s377 + $0x48] sm:$0xf]
        %s388 = sadd.s32 %s375, 22
        %s389 = smul.addr %s388, 4
        %s390 = scalar_lea.vmem %s371, %s389
        %v391 = vld [vmem:[%s390] sm:$0xf]
        %v392 = vld [vmem:[%s390 + $0x8] sm:$0xf]
        %v393 = vld [vmem:[%s390 + $0x10] sm:$0xf]
        %v394 = vld [vmem:[%s390 + $0x18] sm:$0xf]
        %v395 = vld [vmem:[%s390 + $0x20] sm:$0xf]
        %v396 = vld [vmem:[%s390 + $0x28] sm:$0xf]
        %v397 = vld [vmem:[%s390 + $0x30] sm:$0xf]
        %v398 = vld [vmem:[%s390 + $0x38] sm:$0xf]
        %v399 = vld [vmem:[%s390 + $0x40] sm:$0xf]
        %v400 = vld [vmem:[%s390 + $0x48] sm:$0xf]
        %v401 = vld [vmem:[%s377 + $0x4] sm:$0x1]
        %v402 = vld [vmem:[%s377 + $0xc] sm:$0x1]
        %v403 = vld [vmem:[%s377 + $0x14] sm:$0x1]
        %v404 = vld [vmem:[%s377 + $0x1c] sm:$0x1]
        %v405 = vld [vmem:[%s377 + $0x24] sm:$0x1]
        %v406 = vld [vmem:[%s377 + $0x2c] sm:$0x1]
        %v407 = vld [vmem:[%s377 + $0x34] sm:$0x1]
        %v408 = vld [vmem:[%s377 + $0x3c] sm:$0x1]
        %v409 = vld [vmem:[%s377 + $0x44] sm:$0x1]
        %v410 = vld [vmem:[%s377 + $0x4c] sm:$0x1]
        %v421 = vunpack.c.l.b16 %v391
        %v422 = vunpack.c.l.b16 %v392
        %v423 = vunpack.c.l.b16 %v393
        %v424 = vunpack.c.l.b16 %v394
        %v425 = vunpack.c.l.b16 %v395
        %v426 = vunpack.c.l.b16 %v396
        %v427 = vunpack.c.l.b16 %v397
        %v428 = vunpack.c.l.b16 %v398
        %v429 = vunpack.c.l.b16 %v399
        %v430 = vunpack.c.l.b16 %v400
        %v431 = vpack.c.b16 %v421, %v421
        %v432 = vpack.c.b16 %v422, %v422
        %v433 = vpack.c.b16 %v423, %v423
        %v434 = vpack.c.b16 %v424, %v424
        %v435 = vpack.c.b16 %v425, %v425
        %v436 = vpack.c.b16 %v426, %v426
        %v437 = vpack.c.b16 %v427, %v427
        %v438 = vpack.c.b16 %v428, %v428
        %v439 = vpack.c.b16 %v429, %v429
        %v440 = vpack.c.b16 %v430, %v430
        %441 = vrot.lane.b32.xlu0 %v431, 4
        %v442 = vpop.permute.xlu0 %441
        %443 = vrot.lane.b32.xlu0 %v432, 4
        %v444 = vpop.permute.xlu0 %443
        %445 = vrot.lane.b32.xlu0 %v433, 4
        %v446 = vpop.permute.xlu0 %445
        %447 = vrot.lane.b32.xlu0 %v434, 4
        %v448 = vpop.permute.xlu0 %447
        %449 = vrot.lane.b32.xlu0 %v435, 4
        %v450 = vpop.permute.xlu0 %449
        %451 = vrot.lane.b32.xlu0 %v436, 4
        %v452 = vpop.permute.xlu0 %451
        %453 = vrot.lane.b32.xlu0 %v437, 4
        %v454 = vpop.permute.xlu0 %453
        %455 = vrot.lane.b32.xlu0 %v438, 4
        %v456 = vpop.permute.xlu0 %455
        %457 = vrot.lane.b32.xlu0 %v439, 4
        %v458 = vpop.permute.xlu0 %457
        %459 = vrot.lane.b32.xlu0 %v440, 4
        %v460 = vpop.permute.xlu0 %459
        %v481 = vunpack.c.l.b16 %v378
        %v482 = vunpack.c.l.b16 %v401
        %v483 = vunpack.c.l.b16 %v379
        %v484 = vunpack.c.l.b16 %v402
        %v485 = vunpack.c.l.b16 %v380
        %v486 = vunpack.c.l.b16 %v403
        %v487 = vunpack.c.l.b16 %v381
        %v488 = vunpack.c.l.b16 %v404
        %v489 = vunpack.c.l.b16 %v382
        %v490 = vunpack.c.l.b16 %v405
        %v491 = vunpack.c.l.b16 %v383
        %v492 = vunpack.c.l.b16 %v406
        %v493 = vunpack.c.l.b16 %v384
        %v494 = vunpack.c.l.b16 %v407
        %v495 = vunpack.c.l.b16 %v385
        %v496 = vunpack.c.l.b16 %v408
        %v497 = vunpack.c.l.b16 %v386
        %v498 = vunpack.c.l.b16 %v409
        %v499 = vunpack.c.l.b16 %v387
        %v500 = vunpack.c.l.b16 %v410
        %v501 = vpack.c.b16 %v482, %v481
        %v502 = vpack.c.b16 %v484, %v483
        %v503 = vpack.c.b16 %v486, %v485
        %v504 = vpack.c.b16 %v488, %v487
        %v505 = vpack.c.b16 %v490, %v489
        %v506 = vpack.c.b16 %v492, %v491
        %v507 = vpack.c.b16 %v494, %v493
        %v508 = vpack.c.b16 %v496, %v495
        %v509 = vpack.c.b16 %v498, %v497
        %v510 = vpack.c.b16 %v500, %v499
        %v512 = vshrl.u32 %v501, 16
        %v514 = vshll.u32 %v501, 16
        %v516 = vrot.slane %v514, 1
        %v517 = vor.u32 %v512, %v516
        %v519 = vshrl.u32 %v502, 16
        %v521 = vshll.u32 %v502, 16
        %v523 = vrot.slane %v521, 1
        %v524 = vor.u32 %v519, %v523
        %v526 = vshrl.u32 %v503, 16
        %v528 = vshll.u32 %v503, 16
        %v530 = vrot.slane %v528, 1
        %v531 = vor.u32 %v526, %v530
        %v533 = vshrl.u32 %v504, 16
        %v535 = vshll.u32 %v504, 16
        %v537 = vrot.slane %v535, 1
        %v538 = vor.u32 %v533, %v537
        %v540 = vshrl.u32 %v505, 16
        %v542 = vshll.u32 %v505, 16
        %v544 = vrot.slane %v542, 1
        %v545 = vor.u32 %v540, %v544
        %v547 = vshrl.u32 %v506, 16
        %v549 = vshll.u32 %v506, 16
        %v551 = vrot.slane %v549, 1
        %v552 = vor.u32 %v547, %v551
        %v554 = vshrl.u32 %v507, 16
        %v556 = vshll.u32 %v507, 16
        %v558 = vrot.slane %v556, 1
        %v559 = vor.u32 %v554, %v558
        %v561 = vshrl.u32 %v508, 16
        %v563 = vshll.u32 %v508, 16
        %v565 = vrot.slane %v563, 1
        %v566 = vor.u32 %v561, %v565
        %v568 = vshrl.u32 %v509, 16
        %v570 = vshll.u32 %v509, 16
        %v572 = vrot.slane %v570, 1
        %v573 = vor.u32 %v568, %v572
        %v575 = vshrl.u32 %v510, 16
        %v577 = vshll.u32 %v510, 16
        %v579 = vrot.slane %v577, 1
        %v580 = vor.u32 %v575, %v579
        %581 = vrot.lane.b32.xlu0 %v517, 8
        %v582 = vpop.permute.xlu0 %581
        %583 = vrot.lane.b32.xlu0 %v524, 8
        %v584 = vpop.permute.xlu0 %583
        %585 = vrot.lane.b32.xlu0 %v531, 8
        %v586 = vpop.permute.xlu0 %585
        %587 = vrot.lane.b32.xlu0 %v538, 8
        %v588 = vpop.permute.xlu0 %587
        %589 = vrot.lane.b32.xlu0 %v545, 8
        %v590 = vpop.permute.xlu0 %589
        %591 = vrot.lane.b32.xlu0 %v552, 8
        %v592 = vpop.permute.xlu0 %591
        %593 = vrot.lane.b32.xlu0 %v559, 8
        %v594 = vpop.permute.xlu0 %593
        %595 = vrot.lane.b32.xlu0 %v566, 8
        %v596 = vpop.permute.xlu0 %595
        %597 = vrot.lane.b32.xlu0 %v573, 8
        %v598 = vpop.permute.xlu0 %597
        %599 = vrot.lane.b32.xlu0 %v580, 8
        %v600 = vpop.permute.xlu0 %599
        %vm601 = vcmask 31744
        %v604 = vsel %vm601, %v378, %v442
        %v607 = vsel %vm601, %v379, %v444
        %v610 = vsel %vm601, %v380, %v446
        %v613 = vsel %vm601, %v381, %v448
        %v616 = vsel %vm601, %v382, %v450
        %v619 = vsel %vm601, %v383, %v452
        %v622 = vsel %vm601, %v384, %v454
        %v625 = vsel %vm601, %v385, %v456
        %v628 = vsel %vm601, %v386, %v458
        %v631 = vsel %vm601, %v387, %v460
        %vm632 = vcmask 64512
        %v634 = vsel %vm632, %v604, %v582
        %v636 = vsel %vm632, %v607, %v584
        %v638 = vsel %vm632, %v610, %v586
        %v640 = vsel %vm632, %v613, %v588
        %v642 = vsel %vm632, %v616, %v590
        %v644 = vsel %vm632, %v619, %v592
        %v646 = vsel %vm632, %v622, %v594
        %v648 = vsel %vm632, %v625, %v596
        %v650 = vsel %vm632, %v628, %v598
        %v652 = vsel %vm632, %v631, %v600
        %v653 = vld [vmem:[%s1] sm:$0xf]
        %v654 = vld [vmem:[%s1 + $0x4] sm:$0x3]
        %s655 = sadd.s32 %s375, 44
        %s656 = smul.addr %s655, 4
        %s657 = scalar_lea.vmem %s371, %s656
        %v658 = vld [vmem:[%s657] sm:$0xf]
        %v659 = vld [vmem:[%s657 + $0x8] sm:$0xf]
        %v660 = vld [vmem:[%s657 + $0x10] sm:$0xf]
        %v661 = vld [vmem:[%s657 + $0x18] sm:$0xf]
        %v662 = vld [vmem:[%s657 + $0x20] sm:$0xf]
        %v663 = vld [vmem:[%s657 + $0x28] sm:$0xf]
        %v664 = vld [vmem:[%s657 + $0x30] sm:$0xf]
        %v665 = vld [vmem:[%s657 + $0x38] sm:$0xf]
        %v666 = vld [vmem:[%s657 + $0x40] sm:$0xf]
        %v667 = vld [vmem:[%s657 + $0x48] sm:$0xf]
        %s668 = sadd.s32 %s375, 66
        %s669 = smul.addr %s668, 4
        %s670 = scalar_lea.vmem %s371, %s669
        %v671 = vld [vmem:[%s670] sm:$0xf]
        %v672 = vld [vmem:[%s670 + $0x8] sm:$0xf]
        %v673 = vld [vmem:[%s670 + $0x10] sm:$0xf]
        %v674 = vld [vmem:[%s670 + $0x18] sm:$0xf]
        %v675 = vld [vmem:[%s670 + $0x20] sm:$0xf]
        %v676 = vld [vmem:[%s670 + $0x28] sm:$0xf]
        %v677 = vld [vmem:[%s670 + $0x30] sm:$0xf]
        %v678 = vld [vmem:[%s670 + $0x38] sm:$0xf]
        %v679 = vld [vmem:[%s670 + $0x40] sm:$0xf]
        %v680 = vld [vmem:[%s670 + $0x48] sm:$0xf]
        %v681 = vld [vmem:[%s657 + $0x4] sm:$0x1]
        %v682 = vld [vmem:[%s657 + $0xc] sm:$0x1]
        %v683 = vld [vmem:[%s657 + $0x14] sm:$0x1]
        %v684 = vld [vmem:[%s657 + $0x1c] sm:$0x1]
        %v685 = vld [vmem:[%s657 + $0x24] sm:$0x1]
        %v686 = vld [vmem:[%s657 + $0x2c] sm:$0x1]
        %v687 = vld [vmem:[%s657 + $0x34] sm:$0x1]
        %v688 = vld [vmem:[%s657 + $0x3c] sm:$0x1]
        %v689 = vld [vmem:[%s657 + $0x44] sm:$0x1]
        %v690 = vld [vmem:[%s657 + $0x4c] sm:$0x1]
        %v701 = vunpack.c.l.b16 %v671
        %v702 = vunpack.c.l.b16 %v672
        %v703 = vunpack.c.l.b16 %v673
        %v704 = vunpack.c.l.b16 %v674
        %v705 = vunpack.c.l.b16 %v675
        %v706 = vunpack.c.l.b16 %v676
        %v707 = vunpack.c.l.b16 %v677
        %v708 = vunpack.c.l.b16 %v678
        %v709 = vunpack.c.l.b16 %v679
        %v710 = vunpack.c.l.b16 %v680
        %v711 = vpack.c.b16 %v701, %v701
        %v712 = vpack.c.b16 %v702, %v702
        %v713 = vpack.c.b16 %v703, %v703
        %v714 = vpack.c.b16 %v704, %v704
        %v715 = vpack.c.b16 %v705, %v705
        %v716 = vpack.c.b16 %v706, %v706
        %v717 = vpack.c.b16 %v707, %v707
        %v718 = vpack.c.b16 %v708, %v708
        %v719 = vpack.c.b16 %v709, %v709
        %v720 = vpack.c.b16 %v710, %v710
        %721 = vrot.lane.b32.xlu0 %v711, 4
        %v722 = vpop.permute.xlu0 %721
        %723 = vrot.lane.b32.xlu0 %v712, 4
        %v724 = vpop.permute.xlu0 %723
        %725 = vrot.lane.b32.xlu0 %v713, 4
        %v726 = vpop.permute.xlu0 %725
        %727 = vrot.lane.b32.xlu0 %v714, 4
        %v728 = vpop.permute.xlu0 %727
        %729 = vrot.lane.b32.xlu0 %v715, 4
        %v730 = vpop.permute.xlu0 %729
        %731 = vrot.lane.b32.xlu0 %v716, 4
        %v732 = vpop.permute.xlu0 %731
        %733 = vrot.lane.b32.xlu0 %v717, 4
        %v734 = vpop.permute.xlu0 %733
        %735 = vrot.lane.b32.xlu0 %v718, 4
        %v736 = vpop.permute.xlu0 %735
        %737 = vrot.lane.b32.xlu0 %v719, 4
        %v738 = vpop.permute.xlu0 %737
        %739 = vrot.lane.b32.xlu0 %v720, 4
        %v740 = vpop.permute.xlu0 %739
        %v761 = vunpack.c.l.b16 %v658
        %v762 = vunpack.c.l.b16 %v681
        %v763 = vunpack.c.l.b16 %v659
        %v764 = vunpack.c.l.b16 %v682
        %v765 = vunpack.c.l.b16 %v660
        %v766 = vunpack.c.l.b16 %v683
        %v767 = vunpack.c.l.b16 %v661
        %v768 = vunpack.c.l.b16 %v684
        %v769 = vunpack.c.l.b16 %v662
        %v770 = vunpack.c.l.b16 %v685
        %v771 = vunpack.c.l.b16 %v663
        %v772 = vunpack.c.l.b16 %v686
        %v773 = vunpack.c.l.b16 %v664
        %v774 = vunpack.c.l.b16 %v687
        %v775 = vunpack.c.l.b16 %v665
        %v776 = vunpack.c.l.b16 %v688
        %v777 = vunpack.c.l.b16 %v666
        %v778 = vunpack.c.l.b16 %v689
        %v779 = vunpack.c.l.b16 %v667
        %v780 = vunpack.c.l.b16 %v690
        %v781 = vpack.c.b16 %v762, %v761
        %v782 = vpack.c.b16 %v764, %v763
        %v783 = vpack.c.b16 %v766, %v765
        %v784 = vpack.c.b16 %v768, %v767
        %v785 = vpack.c.b16 %v770, %v769
        %v786 = vpack.c.b16 %v772, %v771
        %v787 = vpack.c.b16 %v774, %v773
        %v788 = vpack.c.b16 %v776, %v775
        %v789 = vpack.c.b16 %v778, %v777
        %v790 = vpack.c.b16 %v780, %v779
        %v792 = vshrl.u32 %v781, 16
        %v794 = vshll.u32 %v781, 16
        %v796 = vrot.slane %v794, 1
        %v797 = vor.u32 %v792, %v796
        %v799 = vshrl.u32 %v782, 16
        %v801 = vshll.u32 %v782, 16
        %v803 = vrot.slane %v801, 1
        %v804 = vor.u32 %v799, %v803
        %v806 = vshrl.u32 %v783, 16
        %v808 = vshll.u32 %v783, 16
        %v810 = vrot.slane %v808, 1
        %v811 = vor.u32 %v806, %v810
        %v813 = vshrl.u32 %v784, 16
        %v815 = vshll.u32 %v784, 16
        %v817 = vrot.slane %v815, 1
        %v818 = vor.u32 %v813, %v817
        %v820 = vshrl.u32 %v785, 16
        %v822 = vshll.u32 %v785, 16
        %v824 = vrot.slane %v822, 1
        %v825 = vor.u32 %v820, %v824
        %v827 = vshrl.u32 %v786, 16
        %v829 = vshll.u32 %v786, 16
        %v831 = vrot.slane %v829, 1
        %v832 = vor.u32 %v827, %v831
        %v834 = vshrl.u32 %v787, 16
        %v836 = vshll.u32 %v787, 16
        %v838 = vrot.slane %v836, 1
        %v839 = vor.u32 %v834, %v838
        %v841 = vshrl.u32 %v788, 16
        %v843 = vshll.u32 %v788, 16
        %v845 = vrot.slane %v843, 1
        %v846 = vor.u32 %v841, %v845
        %v848 = vshrl.u32 %v789, 16
        %v850 = vshll.u32 %v789, 16
        %v852 = vrot.slane %v850, 1
        %v853 = vor.u32 %v848, %v852
        %v855 = vshrl.u32 %v790, 16
        %v857 = vshll.u32 %v790, 16
        %v859 = vrot.slane %v857, 1
        %v860 = vor.u32 %v855, %v859
        %861 = vrot.lane.b32.xlu0 %v797, 8
        %v862 = vpop.permute.xlu0 %861
        %863 = vrot.lane.b32.xlu0 %v804, 8
        %v864 = vpop.permute.xlu0 %863
        %865 = vrot.lane.b32.xlu0 %v811, 8
        %v866 = vpop.permute.xlu0 %865
        %867 = vrot.lane.b32.xlu0 %v818, 8
        %v868 = vpop.permute.xlu0 %867
        %869 = vrot.lane.b32.xlu0 %v825, 8
        %v870 = vpop.permute.xlu0 %869
        %871 = vrot.lane.b32.xlu0 %v832, 8
        %v872 = vpop.permute.xlu0 %871
        %873 = vrot.lane.b32.xlu0 %v839, 8
        %v874 = vpop.permute.xlu0 %873
        %875 = vrot.lane.b32.xlu0 %v846, 8
        %v876 = vpop.permute.xlu0 %875
        %877 = vrot.lane.b32.xlu0 %v853, 8
        %v878 = vpop.permute.xlu0 %877
        %879 = vrot.lane.b32.xlu0 %v860, 8
        %v880 = vpop.permute.xlu0 %879
        %v883 = vsel %vm601, %v658, %v722
        %v886 = vsel %vm601, %v659, %v724
        %v889 = vsel %vm601, %v660, %v726
        %v892 = vsel %vm601, %v661, %v728
        %v895 = vsel %vm601, %v662, %v730
        %v898 = vsel %vm601, %v663, %v732
        %v901 = vsel %vm601, %v664, %v734
        %v904 = vsel %vm601, %v665, %v736
        %v907 = vsel %vm601, %v666, %v738
        %v910 = vsel %vm601, %v667, %v740
        %v912 = vsel %vm632, %v883, %v862
        %v914 = vsel %vm632, %v886, %v864
        %v916 = vsel %vm632, %v889, %v866
        %v918 = vsel %vm632, %v892, %v868
        %v920 = vsel %vm632, %v895, %v870
        %v922 = vsel %vm632, %v898, %v872
        %v924 = vsel %vm632, %v901, %v874
        %v926 = vsel %vm632, %v904, %v876
        %v928 = vsel %vm632, %v907, %v878
        %v930 = vsel %vm632, %v910, %v880
        %s931 = scalar_lea.vmem %s1, 8
        %v932 = vld [vmem:[%s931] sm:$0xf]
        %v933 = vld [vmem:[%s931 + $0x4] sm:$0x3]
        %v944 = vunpack.c.l.b16 %v912
        %v945 = vunpack.c.l.b16 %v914
        %v946 = vunpack.c.l.b16 %v916
        %v947 = vunpack.c.l.b16 %v918
        %v948 = vunpack.c.l.b16 %v920
        %v949 = vunpack.c.l.b16 %v922
        %v950 = vunpack.c.l.b16 %v924
        %v951 = vunpack.c.l.b16 %v926
        %v952 = vunpack.c.l.b16 %v928
        %v953 = vunpack.c.l.b16 %v930
        %v954 = vpack.c.b16 %v945, %v944
        %v955 = vpack.c.b16 %v947, %v946
        %v956 = vpack.c.b16 %v949, %v948
        %v957 = vpack.c.b16 %v951, %v950
        %v958 = vpack.c.b16 %v953, %v952
        %v961 = vunpack.c.l.b16 %v932
        %v962 = vunpack.c.l.b16 %v933
        %v963 = vpack.c.b16 %v962, %v961
        %vm964 = vcmask 97280
        %v966 = vsel %vm964, %v954, 0
        %v969 = vsel %vm964, %v955, 0
        %v972 = vsel %vm964, %v956, 0
        %v975 = vsel %vm964, %v957, 0
        %v978 = vsel %vm964, %v958, 0
        %vm980 = vcmask 1045504
        %v982 = vsel %vm980, %v963, 0
        %984 = vmatpush.bf16.msra.mxu0 0
        %985 = vmatpush.bf16.msra.mxu0 0
        %986 = vmatpush.bf16.msra.mxu0 0
        %987 = vmatpush.bf16.msra.mxu0 0
        %988 = vmatpush.bf16.msra.mxu0 0
        %989 = vmatpush.bf16.msra.mxu0 0
        %990 = vmatpush.bf16.msra.mxu0 0
        %991 = vmatpush.bf16.msra.mxu0 %v982
        %992 = vmatmul.bf16.gmra.mxu0 %v966
        %v993 = vpop.f32.mrf.mxu0
        %v994 = vadd.f32 0.0, %v993
        %v995 = vpop.f32.mrf.mxu0
        %v996 = vadd.f32 0.0, %v995
        %997 = vmatmul.bf16.gmra.mxu0 %v969
        %v998 = vpop.f32.mrf.mxu0
        %v999 = vadd.f32 0.0, %v998
        %v1000 = vpop.f32.mrf.mxu0
        %v1001 = vadd.f32 0.0, %v1000
        %1002 = vmatmul.bf16.gmra.mxu0 %v972
        %v1003 = vpop.f32.mrf.mxu0
        %v1004 = vadd.f32 0.0, %v1003
        %v1005 = vpop.f32.mrf.mxu0
        %v1006 = vadd.f32 0.0, %v1005
        %1007 = vmatmul.bf16.gmra.mxu0 %v975
        %v1008 = vpop.f32.mrf.mxu0
        %v1009 = vadd.f32 0.0, %v1008
        %v1010 = vpop.f32.mrf.mxu0
        %v1011 = vadd.f32 0.0, %v1010
        %1012 = vmatmul.bf16.gmra.mxu0 %v978
        %v1013 = vpop.f32.mrf.mxu0
        %v1014 = vadd.f32 0.0, %v1013
        %v1015 = vpop.f32.mrf.mxu0
        %v1016 = vadd.f32 0.0, %v1015
        %1017 = vdwg.mxu0
        %v1028 = vunpack.c.l.b16 %v634
        %v1029 = vunpack.c.l.b16 %v636
        %v1030 = vunpack.c.l.b16 %v638
        %v1031 = vunpack.c.l.b16 %v640
        %v1032 = vunpack.c.l.b16 %v642
        %v1033 = vunpack.c.l.b16 %v644
        %v1034 = vunpack.c.l.b16 %v646
        %v1035 = vunpack.c.l.b16 %v648
        %v1036 = vunpack.c.l.b16 %v650
        %v1037 = vunpack.c.l.b16 %v652
        %v1038 = vpack.c.b16 %v1029, %v1028
        %v1039 = vpack.c.b16 %v1031, %v1030
        %v1040 = vpack.c.b16 %v1033, %v1032
        %v1041 = vpack.c.b16 %v1035, %v1034
        %v1042 = vpack.c.b16 %v1037, %v1036
        %v1045 = vunpack.c.l.b16 %v653
        %v1046 = vunpack.c.l.b16 %v654
        %v1047 = vpack.c.b16 %v1046, %v1045
        %v1049 = vsel %vm964, %v1038, 0
        %v1052 = vsel %vm964, %v1039, 0
        %v1055 = vsel %vm964, %v1040, 0
        %v1058 = vsel %vm964, %v1041, 0
        %v1061 = vsel %vm964, %v1042, 0
        %v1064 = vsel %vm980, %v1047, 0
        %1066 = vmatpush.bf16.msra.mxu0 0
        %1067 = vmatpush.bf16.msra.mxu0 0
        %1068 = vmatpush.bf16.msra.mxu0 0
        %1069 = vmatpush.bf16.msra.mxu0 0
        %1070 = vmatpush.bf16.msra.mxu0 0
        %1071 = vmatpush.bf16.msra.mxu0 0
        %1072 = vmatpush.bf16.msra.mxu0 0
        %1073 = vmatpush.bf16.msra.mxu0 %v1064
        %1074 = vmatmul.bf16.gmra.mxu0 %v1049
        %v1075 = vpop.f32.mrf.mxu0
        %v1076 = vadd.f32 %v994, %v1075
        %v1077 = vpop.f32.mrf.mxu0
        %v1078 = vadd.f32 %v996, %v1077
        %1079 = vmatmul.bf16.gmra.mxu0 %v1052
        %v1080 = vpop.f32.mrf.mxu0
        %v1081 = vadd.f32 %v999, %v1080
        %v1082 = vpop.f32.mrf.mxu0
        %v1083 = vadd.f32 %v1001, %v1082
        %1084 = vmatmul.bf16.gmra.mxu0 %v1055
        %v1085 = vpop.f32.mrf.mxu0
        %v1086 = vadd.f32 %v1004, %v1085
        %v1087 = vpop.f32.mrf.mxu0
        %v1088 = vadd.f32 %v1006, %v1087
        %1089 = vmatmul.bf16.gmra.mxu0 %v1058
        %v1090 = vpop.f32.mrf.mxu0
        %v1091 = vadd.f32 %v1009, %v1090
        %v1092 = vpop.f32.mrf.mxu0
        %v1093 = vadd.f32 %v1011, %v1092
        %1094 = vmatmul.bf16.gmra.mxu0 %v1061
        %v1095 = vpop.f32.mrf.mxu0
        %v1096 = vadd.f32 %v1014, %v1095
        %v1097 = vpop.f32.mrf.mxu0
        %v1098 = vadd.f32 %v1016, %v1097
        %1099 = vdwg.mxu0
        %s1100 = sadd.s32 %s374, 1
        %s1101 = smul.u32 %s1100, 2
        %s1102 = smul.addr %s1101, 4
        %s1103 = scalar_lea.vmem %s371, %s1102
        %v1104 = vld [vmem:[%s1103] sm:$0xf]
        %v1105 = vld [vmem:[%s1103 + $0x8] sm:$0xf]
        %v1106 = vld [vmem:[%s1103 + $0x10] sm:$0xf]
        %v1107 = vld [vmem:[%s1103 + $0x18] sm:$0xf]
        %v1108 = vld [vmem:[%s1103 + $0x20] sm:$0xf]
        %v1109 = vld [vmem:[%s1103 + $0x28] sm:$0xf]
        %v1110 = vld [vmem:[%s1103 + $0x30] sm:$0xf]
        %v1111 = vld [vmem:[%s1103 + $0x38] sm:$0xf]
        %v1112 = vld [vmem:[%s1103 + $0x40] sm:$0xf]
        %v1113 = vld [vmem:[%s1103 + $0x48] sm:$0xf]
        %s1114 = sadd.s32 %s1101, 22
        %s1115 = smul.addr %s1114, 4
        %s1116 = scalar_lea.vmem %s371, %s1115
        %v1117 = vld [vmem:[%s1116] sm:$0xf]
        %v1118 = vld [vmem:[%s1116 + $0x8] sm:$0xf]
        %v1119 = vld [vmem:[%s1116 + $0x10] sm:$0xf]
        %v1120 = vld [vmem:[%s1116 + $0x18] sm:$0xf]
        %v1121 = vld [vmem:[%s1116 + $0x20] sm:$0xf]
        %v1122 = vld [vmem:[%s1116 + $0x28] sm:$0xf]
        %v1123 = vld [vmem:[%s1116 + $0x30] sm:$0xf]
        %v1124 = vld [vmem:[%s1116 + $0x38] sm:$0xf]
        %v1125 = vld [vmem:[%s1116 + $0x40] sm:$0xf]
        %v1126 = vld [vmem:[%s1116 + $0x48] sm:$0xf]
        %v1127 = vld [vmem:[%s1103 + $0x4] sm:$0x1]
        %v1128 = vld [vmem:[%s1103 + $0xc] sm:$0x1]
        %v1129 = vld [vmem:[%s1103 + $0x14] sm:$0x1]
        %v1130 = vld [vmem:[%s1103 + $0x1c] sm:$0x1]
        %v1131 = vld [vmem:[%s1103 + $0x24] sm:$0x1]
        %v1132 = vld [vmem:[%s1103 + $0x2c] sm:$0x1]
        %v1133 = vld [vmem:[%s1103 + $0x34] sm:$0x1]
        %v1134 = vld [vmem:[%s1103 + $0x3c] sm:$0x1]
        %v1135 = vld [vmem:[%s1103 + $0x44] sm:$0x1]
        %v1136 = vld [vmem:[%s1103 + $0x4c] sm:$0x1]
        %v1147 = vunpack.c.l.b16 %v1117
        %v1148 = vunpack.c.l.b16 %v1118
        %v1149 = vunpack.c.l.b16 %v1119
        %v1150 = vunpack.c.l.b16 %v1120
        %v1151 = vunpack.c.l.b16 %v1121
        %v1152 = vunpack.c.l.b16 %v1122
        %v1153 = vunpack.c.l.b16 %v1123
        %v1154 = vunpack.c.l.b16 %v1124
        %v1155 = vunpack.c.l.b16 %v1125
        %v1156 = vunpack.c.l.b16 %v1126
        %v1157 = vpack.c.b16 %v1147, %v1147
        %v1158 = vpack.c.b16 %v1148, %v1148
        %v1159 = vpack.c.b16 %v1149, %v1149
        %v1160 = vpack.c.b16 %v1150, %v1150
        %v1161 = vpack.c.b16 %v1151, %v1151
        %v1162 = vpack.c.b16 %v1152, %v1152
        %v1163 = vpack.c.b16 %v1153, %v1153
        %v1164 = vpack.c.b16 %v1154, %v1154
        %v1165 = vpack.c.b16 %v1155, %v1155
        %v1166 = vpack.c.b16 %v1156, %v1156
        %1167 = vrot.lane.b32.xlu0 %v1157, 4
        %v1168 = vpop.permute.xlu0 %1167
        %1169 = vrot.lane.b32.xlu0 %v1158, 4
        %v1170 = vpop.permute.xlu0 %1169
        %1171 = vrot.lane.b32.xlu0 %v1159, 4
        %v1172 = vpop.permute.xlu0 %1171
        %1173 = vrot.lane.b32.xlu0 %v1160, 4
        %v1174 = vpop.permute.xlu0 %1173
        %1175 = vrot.lane.b32.xlu0 %v1161, 4
        %v1176 = vpop.permute.xlu0 %1175
        %1177 = vrot.lane.b32.xlu0 %v1162, 4
        %v1178 = vpop.permute.xlu0 %1177
        %1179 = vrot.lane.b32.xlu0 %v1163, 4
        %v1180 = vpop.permute.xlu0 %1179
        %1181 = vrot.lane.b32.xlu0 %v1164, 4
        %v1182 = vpop.permute.xlu0 %1181
        %1183 = vrot.lane.b32.xlu0 %v1165, 4
        %v1184 = vpop.permute.xlu0 %1183
        %1185 = vrot.lane.b32.xlu0 %v1166, 4
        %v1186 = vpop.permute.xlu0 %1185
        %v1207 = vunpack.c.l.b16 %v1104
        %v1208 = vunpack.c.l.b16 %v1127
        %v1209 = vunpack.c.l.b16 %v1105
        %v1210 = vunpack.c.l.b16 %v1128
        %v1211 = vunpack.c.l.b16 %v1106
        %v1212 = vunpack.c.l.b16 %v1129
        %v1213 = vunpack.c.l.b16 %v1107
        %v1214 = vunpack.c.l.b16 %v1130
        %v1215 = vunpack.c.l.b16 %v1108
        %v1216 = vunpack.c.l.b16 %v1131
        %v1217 = vunpack.c.l.b16 %v1109
        %v1218 = vunpack.c.l.b16 %v1132
        %v1219 = vunpack.c.l.b16 %v1110
        %v1220 = vunpack.c.l.b16 %v1133
        %v1221 = vunpack.c.l.b16 %v1111
        %v1222 = vunpack.c.l.b16 %v1134
        %v1223 = vunpack.c.l.b16 %v1112
        %v1224 = vunpack.c.l.b16 %v1135
        %v1225 = vunpack.c.l.b16 %v1113
        %v1226 = vunpack.c.l.b16 %v1136
        %v1227 = vpack.c.b16 %v1208, %v1207
        %v1228 = vpack.c.b16 %v1210, %v1209
        %v1229 = vpack.c.b16 %v1212, %v1211
        %v1230 = vpack.c.b16 %v1214, %v1213
        %v1231 = vpack.c.b16 %v1216, %v1215
        %v1232 = vpack.c.b16 %v1218, %v1217
        %v1233 = vpack.c.b16 %v1220, %v1219
        %v1234 = vpack.c.b16 %v1222, %v1221
        %v1235 = vpack.c.b16 %v1224, %v1223
        %v1236 = vpack.c.b16 %v1226, %v1225
        %v1238 = vshrl.u32 %v1227, 16
        %v1240 = vshll.u32 %v1227, 16
        %v1242 = vrot.slane %v1240, 1
        %v1243 = vor.u32 %v1238, %v1242
        %v1245 = vshrl.u32 %v1228, 16
        %v1247 = vshll.u32 %v1228, 16
        %v1249 = vrot.slane %v1247, 1
        %v1250 = vor.u32 %v1245, %v1249
        %v1252 = vshrl.u32 %v1229, 16
        %v1254 = vshll.u32 %v1229, 16
        %v1256 = vrot.slane %v1254, 1
        %v1257 = vor.u32 %v1252, %v1256
        %v1259 = vshrl.u32 %v1230, 16
        %v1261 = vshll.u32 %v1230, 16
        %v1263 = vrot.slane %v1261, 1
        %v1264 = vor.u32 %v1259, %v1263
        %v1266 = vshrl.u32 %v1231, 16
        %v1268 = vshll.u32 %v1231, 16
        %v1270 = vrot.slane %v1268, 1
        %v1271 = vor.u32 %v1266, %v1270
        %v1273 = vshrl.u32 %v1232, 16
        %v1275 = vshll.u32 %v1232, 16
        %v1277 = vrot.slane %v1275, 1
        %v1278 = vor.u32 %v1273, %v1277
        %v1280 = vshrl.u32 %v1233, 16
        %v1282 = vshll.u32 %v1233, 16
        %v1284 = vrot.slane %v1282, 1
        %v1285 = vor.u32 %v1280, %v1284
        %v1287 = vshrl.u32 %v1234, 16
        %v1289 = vshll.u32 %v1234, 16
        %v1291 = vrot.slane %v1289, 1
        %v1292 = vor.u32 %v1287, %v1291
        %v1294 = vshrl.u32 %v1235, 16
        %v1296 = vshll.u32 %v1235, 16
        %v1298 = vrot.slane %v1296, 1
        %v1299 = vor.u32 %v1294, %v1298
        %v1301 = vshrl.u32 %v1236, 16
        %v1303 = vshll.u32 %v1236, 16
        %v1305 = vrot.slane %v1303, 1
        %v1306 = vor.u32 %v1301, %v1305
        %1307 = vrot.lane.b32.xlu0 %v1243, 8
        %v1308 = vpop.permute.xlu0 %1307
        %1309 = vrot.lane.b32.xlu0 %v1250, 8
        %v1310 = vpop.permute.xlu0 %1309
        %1311 = vrot.lane.b32.xlu0 %v1257, 8
        %v1312 = vpop.permute.xlu0 %1311
        %1313 = vrot.lane.b32.xlu0 %v1264, 8
        %v1314 = vpop.permute.xlu0 %1313
        %1315 = vrot.lane.b32.xlu0 %v1271, 8
        %v1316 = vpop.permute.xlu0 %1315
        %1317 = vrot.lane.b32.xlu0 %v1278, 8
        %v1318 = vpop.permute.xlu0 %1317
        %1319 = vrot.lane.b32.xlu0 %v1285, 8
        %v1320 = vpop.permute.xlu0 %1319
        %1321 = vrot.lane.b32.xlu0 %v1292, 8
        %v1322 = vpop.permute.xlu0 %1321
        %1323 = vrot.lane.b32.xlu0 %v1299, 8
        %v1324 = vpop.permute.xlu0 %1323
        %1325 = vrot.lane.b32.xlu0 %v1306, 8
        %v1326 = vpop.permute.xlu0 %1325
        %v1329 = vsel %vm601, %v1104, %v1168
        %v1332 = vsel %vm601, %v1105, %v1170
        %v1335 = vsel %vm601, %v1106, %v1172
        %v1338 = vsel %vm601, %v1107, %v1174
        %v1341 = vsel %vm601, %v1108, %v1176
        %v1344 = vsel %vm601, %v1109, %v1178
        %v1347 = vsel %vm601, %v1110, %v1180
        %v1350 = vsel %vm601, %v1111, %v1182
        %v1353 = vsel %vm601, %v1112, %v1184
        %v1356 = vsel %vm601, %v1113, %v1186
        %v1358 = vsel %vm632, %v1329, %v1308
        %v1360 = vsel %vm632, %v1332, %v1310
        %v1362 = vsel %vm632, %v1335, %v1312
        %v1364 = vsel %vm632, %v1338, %v1314
        %v1366 = vsel %vm632, %v1341, %v1316
        %v1368 = vsel %vm632, %v1344, %v1318
        %v1370 = vsel %vm632, %v1347, %v1320
        %v1372 = vsel %vm632, %v1350, %v1322
        %v1374 = vsel %vm632, %v1353, %v1324
        %v1376 = vsel %vm632, %v1356, %v1326
        %s1377 = scalar_lea.vmem %s1, 16
        %v1378 = vld [vmem:[%s1377] sm:$0xf]
        %v1379 = vld [vmem:[%s1377 + $0x4] sm:$0x3]
        %v1390 = vunpack.c.l.b16 %v1358
        %v1391 = vunpack.c.l.b16 %v1360
        %v1392 = vunpack.c.l.b16 %v1362
        %v1393 = vunpack.c.l.b16 %v1364
        %v1394 = vunpack.c.l.b16 %v1366
        %v1395 = vunpack.c.l.b16 %v1368
        %v1396 = vunpack.c.l.b16 %v1370
        %v1397 = vunpack.c.l.b16 %v1372
        %v1398 = vunpack.c.l.b16 %v1374
        %v1399 = vunpack.c.l.b16 %v1376
        %v1400 = vpack.c.b16 %v1391, %v1390
        %v1401 = vpack.c.b16 %v1393, %v1392
        %v1402 = vpack.c.b16 %v1395, %v1394
        %v1403 = vpack.c.b16 %v1397, %v1396
        %v1404 = vpack.c.b16 %v1399, %v1398
        %v1407 = vunpack.c.l.b16 %v1378
        %v1408 = vunpack.c.l.b16 %v1379
        %v1409 = vpack.c.b16 %v1408, %v1407
        %v1411 = vsel %vm964, %v1400, 0
        %v1414 = vsel %vm964, %v1401, 0
        %v1417 = vsel %vm964, %v1402, 0
        %v1420 = vsel %vm964, %v1403, 0
        %v1423 = vsel %vm964, %v1404, 0
        %v1426 = vsel %vm980, %v1409, 0
        %1428 = vmatpush.bf16.msra.mxu0 0
        %1429 = vmatpush.bf16.msra.mxu0 0
        %1430 = vmatpush.bf16.msra.mxu0 0
        %1431 = vmatpush.bf16.msra.mxu0 0
        %1432 = vmatpush.bf16.msra.mxu0 0
        %1433 = vmatpush.bf16.msra.mxu0 0
        %1434 = vmatpush.bf16.msra.mxu0 0
        %1435 = vmatpush.bf16.msra.mxu0 %v1426
        %1436 = vmatmul.bf16.gmra.mxu0 %v1411
        %v1437 = vpop.f32.mrf.mxu0
        %v1438 = vadd.f32 0.0, %v1437
        %v1439 = vpop.f32.mrf.mxu0
        %v1440 = vadd.f32 0.0, %v1439
        %1441 = vmatmul.bf16.gmra.mxu0 %v1414
        %v1442 = vpop.f32.mrf.mxu0
        %v1443 = vadd.f32 0.0, %v1442
        %v1444 = vpop.f32.mrf.mxu0
        %v1445 = vadd.f32 0.0, %v1444
        %1446 = vmatmul.bf16.gmra.mxu0 %v1417
        %v1447 = vpop.f32.mrf.mxu0
        %v1448 = vadd.f32 0.0, %v1447
        %v1449 = vpop.f32.mrf.mxu0
        %v1450 = vadd.f32 0.0, %v1449
        %1451 = vmatmul.bf16.gmra.mxu0 %v1420
        %v1452 = vpop.f32.mrf.mxu0
        %v1453 = vadd.f32 0.0, %v1452
        %v1454 = vpop.f32.mrf.mxu0
        %v1455 = vadd.f32 0.0, %v1454
        %1456 = vmatmul.bf16.gmra.mxu0 %v1423
        %v1457 = vpop.f32.mrf.mxu0
        %v1458 = vadd.f32 0.0, %v1457
        %v1459 = vpop.f32.mrf.mxu0
        %v1460 = vadd.f32 0.0, %v1459
        %1461 = vdwg.mxu0
        %v1462 = vadd.f32 %v1076, %v1438
        %v1463 = vadd.f32 %v1078, %v1440
        %v1464 = vadd.f32 %v1081, %v1443
        %v1465 = vadd.f32 %v1083, %v1445
        %v1466 = vadd.f32 %v1086, %v1448
        %v1467 = vadd.f32 %v1088, %v1450
        %v1468 = vadd.f32 %v1091, %v1453
        %v1469 = vadd.f32 %v1093, %v1455
        %v1470 = vadd.f32 %v1096, %v1458
        %v1471 = vadd.f32 %v1098, %v1460
        %v1472 = vld [vmem:[%s2] sm:$0x1]
        %v1474 = vperm.slane %v1472, 0
        %v1476 = vmul.f32 %v1462, %v1474
        %v1477 = vmul.f32 %v1463, %v1474
        %v1478 = vmul.f32 %v1464, %v1474
        %v1479 = vmul.f32 %v1465, %v1474
        %v1480 = vmul.f32 %v1466, %v1474
        %v1481 = vmul.f32 %v1467, %v1474
        %v1482 = vmul.f32 %v1468, %v1474
        %v1483 = vmul.f32 %v1469, %v1474
        %v1484 = vmul.f32 %v1470, %v1474
        %v1485 = vmul.f32 %v1471, %v1474
        %v1486 = vld [vmem:[%s3] sm:$0x1]
        %v1488 = vperm.slane %v1486, 0
        %v1490 = vadd.f32 %v1476, %v1488
        %v1491 = vadd.f32 %v1477, %v1488
        %v1492 = vadd.f32 %v1478, %v1488
        %v1493 = vadd.f32 %v1479, %v1488
        %v1494 = vadd.f32 %v1480, %v1488
        %v1495 = vadd.f32 %v1481, %v1488
        %v1496 = vadd.f32 %v1482, %v1488
        %v1497 = vadd.f32 %v1483, %v1488
        %v1498 = vadd.f32 %v1484, %v1488
        %v1499 = vadd.f32 %v1485, %v1488
        %v1500 = vmax.f32 %v1490, 0.0
        %v1501 = vmax.f32 %v1491, 0.0
        %v1502 = vmax.f32 %v1492, 0.0
        %v1503 = vmax.f32 %v1493, 0.0
        %v1504 = vmax.f32 %v1494, 0.0
        %v1505 = vmax.f32 %v1495, 0.0
        %v1506 = vmax.f32 %v1496, 0.0
        %v1507 = vmax.f32 %v1497, 0.0
        %v1508 = vmax.f32 %v1498, 0.0
        %v1509 = vmax.f32 %v1499, 0.0
        %s1510 = ssub.s32 %s374, 1
        %v1511 = vstv %s1510
        %v1512 = vadd.s32 %v1511, 1
        %v1513 = vadd.s32 %v1511, 2
        %v1514 = vadd.s32 %v1511, 3
        %v1515 = vadd.s32 %v1511, 4
        %v1516 = vadd.s32 %v1511, 5
        %v1517 = vadd.s32 %v1511, 6
        %v1518 = vadd.s32 %v1511, 7
        %v1519 = vadd.s32 %v1511, 8
        %v1520 = vadd.s32 %v1511, 9
        %vm1521 = vcmp.ge.s32.totalorder %v1511, 0
        %vm1522 = vcmp.ge.s32.totalorder %v1512, 0
        %vm1523 = vcmp.ge.s32.totalorder %v1513, 0
        %vm1524 = vcmp.ge.s32.totalorder %v1514, 0
        %vm1525 = vcmp.ge.s32.totalorder %v1515, 0
        %vm1526 = vcmp.ge.s32.totalorder %v1516, 0
        %vm1527 = vcmp.ge.s32.totalorder %v1517, 0
        %vm1528 = vcmp.ge.s32.totalorder %v1518, 0
        %vm1529 = vcmp.ge.s32.totalorder %v1519, 0
        %vm1530 = vcmp.ge.s32.totalorder %v1520, 0
        %vm1531 = vcmp.lt.s32.totalorder %v1511, 8
        %vm1532 = vcmp.lt.s32.totalorder %v1512, 8
        %vm1533 = vcmp.lt.s32.totalorder %v1513, 8
        %vm1534 = vcmp.lt.s32.totalorder %v1514, 8
        %vm1535 = vcmp.lt.s32.totalorder %v1515, 8
        %vm1536 = vcmp.lt.s32.totalorder %v1516, 8
        %vm1537 = vcmp.lt.s32.totalorder %v1517, 8
        %vm1538 = vcmp.lt.s32.totalorder %v1518, 8
        %vm1539 = vcmp.lt.s32.totalorder %v1519, 8
        %vm1540 = vcmp.lt.s32.totalorder %v1520, 8
        %vm1541 = vmand %vm1521, %vm1531
        %vm1542 = vmand %vm1522, %vm1532
        %vm1543 = vmand %vm1523, %vm1533
        %vm1544 = vmand %vm1524, %vm1534
        %vm1545 = vmand %vm1525, %vm1535
        %vm1546 = vmand %vm1526, %vm1536
        %vm1547 = vmand %vm1527, %vm1537
        %vm1548 = vmand %vm1528, %vm1538
        %vm1549 = vmand %vm1529, %vm1539
        %vm1550 = vmand %vm1530, %vm1540
        %v1551 = vsel %vm1541, 1, 0
        %v1552 = vsel %vm1542, 1, 0
        %v1553 = vsel %vm1543, 1, 0
        %v1554 = vsel %vm1544, 1, 0
        %v1555 = vsel %vm1545, 1, 0
        %v1556 = vsel %vm1546, 1, 0
        %v1557 = vsel %vm1547, 1, 0
        %v1558 = vsel %vm1548, 1, 0
        %v1559 = vsel %vm1549, 1, 0
        %v1560 = vsel %vm1550, 1, 0
        %vm1561 = vcmp.eq.s32.totalorder %v1551, 1
        %vm1562 = vcmp.eq.s32.totalorder %v1552, 1
        %vm1563 = vcmp.eq.s32.totalorder %v1553, 1
        %vm1564 = vcmp.eq.s32.totalorder %v1554, 1
        %vm1565 = vcmp.eq.s32.totalorder %v1555, 1
        %vm1566 = vcmp.eq.s32.totalorder %v1556, 1
        %vm1567 = vcmp.eq.s32.totalorder %v1557, 1
        %vm1568 = vcmp.eq.s32.totalorder %v1558, 1
        %vm1569 = vcmp.eq.s32.totalorder %v1559, 1
        %vm1570 = vcmp.eq.s32.totalorder %v1560, 1
        %v1571 = vsel %vm1561, %v1500, 0.0
        %v1572 = vsel %vm1562, %v1501, 0.0
        %v1573 = vsel %vm1563, %v1502, 0.0
        %v1574 = vsel %vm1564, %v1503, 0.0
        %v1575 = vsel %vm1565, %v1504, 0.0
        %v1576 = vsel %vm1566, %v1505, 0.0
        %v1577 = vsel %vm1567, %v1506, 0.0
        %v1578 = vsel %vm1568, %v1507, 0.0
        %v1579 = vsel %vm1569, %v1508, 0.0
        %v1580 = vsel %vm1570, %v1509, 0.0
        %v1581 = vpack.c.bf16 %v1571, %v1571
        %v1582 = vpack.c.bf16 %v1572, %v1572
        %v1583 = vpack.c.bf16 %v1573, %v1573
        %v1584 = vpack.c.bf16 %v1574, %v1574
        %v1585 = vpack.c.bf16 %v1575, %v1575
        %v1586 = vpack.c.bf16 %v1576, %v1576
        %v1587 = vpack.c.bf16 %v1577, %v1577
        %v1588 = vpack.c.bf16 %v1578, %v1578
        %v1589 = vpack.c.bf16 %v1579, %v1579
        %v1590 = vpack.c.bf16 %v1580, %v1580
        %vm1591 = vcmask 57344
        %vm1592 = vsmask.f32 256
        %vm1593 = vmand %vm1591, %vm1592
        %v1594 = vld [vmem:[#allocation2] sm:$0x1]
        %v1595 = vsel %vm1593, 0, %v1594
        %1596 = vst [vmem:[#allocation2] sm:$0x1] %v1595
        %v1597 = vld [vmem:[#allocation2 + $0x8] sm:$0x1]
        %v1598 = vsel %vm1593, 0, %v1597
        %1599 = vst [vmem:[#allocation2 + $0x8] sm:$0x1] %v1598
        %v1600 = vld [vmem:[#allocation2 + $0x10] sm:$0x1]
        %v1601 = vsel %vm1593, 0, %v1600
        %1602 = vst [vmem:[#allocation2 + $0x10] sm:$0x1] %v1601
        %v1603 = vld [vmem:[#allocation2 + $0x18] sm:$0x1]
        %v1604 = vsel %vm1593, 0, %v1603
        %1605 = vst [vmem:[#allocation2 + $0x18] sm:$0x1] %v1604
        %v1606 = vld [vmem:[#allocation2 + $0x20] sm:$0x1]
        %v1607 = vsel %vm1593, 0, %v1606
        %1608 = vst [vmem:[#allocation2 + $0x20] sm:$0x1] %v1607
        %v1609 = vld [vmem:[#allocation2 + $0x28] sm:$0x1]
        %v1610 = vsel %vm1593, 0, %v1609
        %1611 = vst [vmem:[#allocation2 + $0x28] sm:$0x1] %v1610
        %v1612 = vld [vmem:[#allocation2 + $0x30] sm:$0x1]
        %v1613 = vsel %vm1593, 0, %v1612
        %1614 = vst [vmem:[#allocation2 + $0x30] sm:$0x1] %v1613
        %v1615 = vld [vmem:[#allocation2 + $0x38] sm:$0x1]
        %v1616 = vsel %vm1593, 0, %v1615
        %1617 = vst [vmem:[#allocation2 + $0x38] sm:$0x1] %v1616
        %v1618 = vld [vmem:[#allocation2 + $0x40] sm:$0x1]
        %v1619 = vsel %vm1593, 0, %v1618
        %1620 = vst [vmem:[#allocation2 + $0x40] sm:$0x1] %v1619
        %v1621 = vld [vmem:[#allocation2 + $0x48] sm:$0x1]
        %v1622 = vsel %vm1593, 0, %v1621
        %1623 = vst [vmem:[#allocation2 + $0x48] sm:$0x1] %v1622
        %vm1624 = vsmask.f32 7938
        %vm1625 = vmand %vm1591, %vm1624
        %v1626 = vld [vmem:[#allocation2 + $0x4] sm:$0x1]
        %v1627 = vsel %vm1625, 0, %v1626
        %1628 = vst [vmem:[#allocation2 + $0x4] sm:$0x1] %v1627
        %v1629 = vld [vmem:[#allocation2 + $0xc] sm:$0x1]
        %v1630 = vsel %vm1625, 0, %v1629
        %1631 = vst [vmem:[#allocation2 + $0xc] sm:$0x1] %v1630
        %v1632 = vld [vmem:[#allocation2 + $0x14] sm:$0x1]
        %v1633 = vsel %vm1625, 0, %v1632
        %1634 = vst [vmem:[#allocation2 + $0x14] sm:$0x1] %v1633
        %v1635 = vld [vmem:[#allocation2 + $0x1c] sm:$0x1]
        %v1636 = vsel %vm1625, 0, %v1635
        %1637 = vst [vmem:[#allocation2 + $0x1c] sm:$0x1] %v1636
        %v1638 = vld [vmem:[#allocation2 + $0x24] sm:$0x1]
        %v1639 = vsel %vm1625, 0, %v1638
        %1640 = vst [vmem:[#allocation2 + $0x24] sm:$0x1] %v1639
        %v1641 = vld [vmem:[#allocation2 + $0x2c] sm:$0x1]
        %v1642 = vsel %vm1625, 0, %v1641
        %1643 = vst [vmem:[#allocation2 + $0x2c] sm:$0x1] %v1642
        %v1644 = vld [vmem:[#allocation2 + $0x34] sm:$0x1]
        %v1645 = vsel %vm1625, 0, %v1644
        %1646 = vst [vmem:[#allocation2 + $0x34] sm:$0x1] %v1645
        %v1647 = vld [vmem:[#allocation2 + $0x3c] sm:$0x1]
        %v1648 = vsel %vm1625, 0, %v1647
        %1649 = vst [vmem:[#allocation2 + $0x3c] sm:$0x1] %v1648
        %v1650 = vld [vmem:[#allocation2 + $0x44] sm:$0x1]
        %v1651 = vsel %vm1625, 0, %v1650
        %1652 = vst [vmem:[#allocation2 + $0x44] sm:$0x1] %v1651
        %v1653 = vld [vmem:[#allocation2 + $0x4c] sm:$0x1]
        %v1654 = vsel %vm1625, 0, %v1653
        %1655 = vst [vmem:[#allocation2 + $0x4c] sm:$0x1] %v1654
        %v1657 = vshrl.u32 %v1581, 16
        %v1659 = vrot.slane %v1657, 7
        %v1660 = vshll.u32 %v1581, 16
        %v1662 = vor.u32 %v1659, %v1660
        %v1663 = vrot.slane %v1659, 4
        %v1665 = vshrl.u32 %v1582, 16
        %v1667 = vrot.slane %v1665, 7
        %v1668 = vshll.u32 %v1582, 16
        %v1670 = vor.u32 %v1667, %v1668
        %v1671 = vrot.slane %v1667, 4
        %v1673 = vshrl.u32 %v1583, 16
        %v1675 = vrot.slane %v1673, 7
        %v1676 = vshll.u32 %v1583, 16
        %v1678 = vor.u32 %v1675, %v1676
        %v1679 = vrot.slane %v1675, 4
        %v1681 = vshrl.u32 %v1584, 16
        %v1683 = vrot.slane %v1681, 7
        %v1684 = vshll.u32 %v1584, 16
        %v1686 = vor.u32 %v1683, %v1684
        %v1687 = vrot.slane %v1683, 4
        %v1689 = vshrl.u32 %v1585, 16
        %v1691 = vrot.slane %v1689, 7
        %v1692 = vshll.u32 %v1585, 16
        %v1694 = vor.u32 %v1691, %v1692
        %v1695 = vrot.slane %v1691, 4
        %v1697 = vshrl.u32 %v1586, 16
        %v1699 = vrot.slane %v1697, 7
        %v1700 = vshll.u32 %v1586, 16
        %v1702 = vor.u32 %v1699, %v1700
        %v1703 = vrot.slane %v1699, 4
        %v1705 = vshrl.u32 %v1587, 16
        %v1707 = vrot.slane %v1705, 7
        %v1708 = vshll.u32 %v1587, 16
        %v1710 = vor.u32 %v1707, %v1708
        %v1711 = vrot.slane %v1707, 4
        %v1713 = vshrl.u32 %v1588, 16
        %v1715 = vrot.slane %v1713, 7
        %v1716 = vshll.u32 %v1588, 16
        %v1718 = vor.u32 %v1715, %v1716
        %v1719 = vrot.slane %v1715, 4
        %v1721 = vshrl.u32 %v1589, 16
        %v1723 = vrot.slane %v1721, 7
        %v1724 = vshll.u32 %v1589, 16
        %v1726 = vor.u32 %v1723, %v1724
        %v1727 = vrot.slane %v1723, 4
        %v1729 = vshrl.u32 %v1590, 16
        %v1731 = vrot.slane %v1729, 7
        %v1732 = vshll.u32 %v1590, 16
        %v1734 = vor.u32 %v1731, %v1732
        %v1735 = vrot.slane %v1731, 4
        %vm1756 = vcmask 60416
        %vm1757 = vmand %vm1756, %vm1624
        %v1758 = vld [vmem:[#allocation2] sm:$0xf]
        %v1759 = vsel %vm1757, %v1662, %v1758
        %1760 = vst [vmem:[#allocation2] sm:$0xf] %v1759
        %v1761 = vld [vmem:[#allocation2 + $0x4] sm:$0x1]
        %v1762 = vsel %vm1593, %v1663, %v1761
        %1763 = vst [vmem:[#allocation2 + $0x4] sm:$0x1] %v1762
        %v1764 = vld [vmem:[#allocation2 + $0x8] sm:$0xf]
        %v1765 = vsel %vm1757, %v1670, %v1764
        %1766 = vst [vmem:[#allocation2 + $0x8] sm:$0xf] %v1765
        %v1767 = vld [vmem:[#allocation2 + $0xc] sm:$0x1]
        %v1768 = vsel %vm1593, %v1671, %v1767
        %1769 = vst [vmem:[#allocation2 + $0xc] sm:$0x1] %v1768
        %v1770 = vld [vmem:[#allocation2 + $0x10] sm:$0xf]
        %v1771 = vsel %vm1757, %v1678, %v1770
        %1772 = vst [vmem:[#allocation2 + $0x10] sm:$0xf] %v1771
        %v1773 = vld [vmem:[#allocation2 + $0x14] sm:$0x1]
        %v1774 = vsel %vm1593, %v1679, %v1773
        %1775 = vst [vmem:[#allocation2 + $0x14] sm:$0x1] %v1774
        %v1776 = vld [vmem:[#allocation2 + $0x18] sm:$0xf]
        %v1777 = vsel %vm1757, %v1686, %v1776
        %1778 = vst [vmem:[#allocation2 + $0x18] sm:$0xf] %v1777
        %v1779 = vld [vmem:[#allocation2 + $0x1c] sm:$0x1]
        %v1780 = vsel %vm1593, %v1687, %v1779
        %1781 = vst [vmem:[#allocation2 + $0x1c] sm:$0x1] %v1780
        %v1782 = vld [vmem:[#allocation2 + $0x20] sm:$0xf]
        %v1783 = vsel %vm1757, %v1694, %v1782
        %1784 = vst [vmem:[#allocation2 + $0x20] sm:$0xf] %v1783
        %v1785 = vld [vmem:[#allocation2 + $0x24] sm:$0x1]
        %v1786 = vsel %vm1593, %v1695, %v1785
        %1787 = vst [vmem:[#allocation2 + $0x24] sm:$0x1] %v1786
        %v1788 = vld [vmem:[#allocation2 + $0x28] sm:$0xf]
        %v1789 = vsel %vm1757, %v1702, %v1788
        %1790 = vst [vmem:[#allocation2 + $0x28] sm:$0xf] %v1789
        %v1791 = vld [vmem:[#allocation2 + $0x2c] sm:$0x1]
        %v1792 = vsel %vm1593, %v1703, %v1791
        %1793 = vst [vmem:[#allocation2 + $0x2c] sm:$0x1] %v1792
        %v1794 = vld [vmem:[#allocation2 + $0x30] sm:$0xf]
        %v1795 = vsel %vm1757, %v1710, %v1794
        %1796 = vst [vmem:[#allocation2 + $0x30] sm:$0xf] %v1795
        %v1797 = vld [vmem:[#allocation2 + $0x34] sm:$0x1]
        %v1798 = vsel %vm1593, %v1711, %v1797
        %1799 = vst [vmem:[#allocation2 + $0x34] sm:$0x1] %v1798
        %v1800 = vld [vmem:[#allocation2 + $0x38] sm:$0xf]
        %v1801 = vsel %vm1757, %v1718, %v1800
        %1802 = vst [vmem:[#allocation2 + $0x38] sm:$0xf] %v1801
        %v1803 = vld [vmem:[#allocation2 + $0x3c] sm:$0x1]
        %v1804 = vsel %vm1593, %v1719, %v1803
        %1805 = vst [vmem:[#allocation2 + $0x3c] sm:$0x1] %v1804
        %v1806 = vld [vmem:[#allocation2 + $0x40] sm:$0xf]
        %v1807 = vsel %vm1757, %v1726, %v1806
        %1808 = vst [vmem:[#allocation2 + $0x40] sm:$0xf] %v1807
        %v1809 = vld [vmem:[#allocation2 + $0x44] sm:$0x1]
        %v1810 = vsel %vm1593, %v1727, %v1809
        %1811 = vst [vmem:[#allocation2 + $0x44] sm:$0x1] %v1810
        %v1812 = vld [vmem:[#allocation2 + $0x48] sm:$0xf]
        %v1813 = vsel %vm1757, %v1734, %v1812
        %1814 = vst [vmem:[#allocation2 + $0x48] sm:$0xf] %v1813
        %v1815 = vld [vmem:[#allocation2 + $0x4c] sm:$0x1]
        %v1816 = vsel %vm1593, %v1735, %v1815
        %1817 = vst [vmem:[#allocation2 + $0x4c] sm:$0x1] %v1816
        %v1818 = vld [vmem:[#allocation2] sm:$0xf]
        %v1819 = vld [vmem:[#allocation2 + $0x8] sm:$0xf]
        %v1820 = vld [vmem:[#allocation2 + $0x10] sm:$0xf]
        %v1821 = vld [vmem:[#allocation2 + $0x18] sm:$0xf]
        %v1822 = vld [vmem:[#allocation2 + $0x20] sm:$0xf]
        %v1823 = vld [vmem:[#allocation2 + $0x28] sm:$0xf]
        %v1824 = vld [vmem:[#allocation2 + $0x30] sm:$0xf]
        %v1825 = vld [vmem:[#allocation2 + $0x38] sm:$0xf]
        %v1826 = vld [vmem:[#allocation2 + $0x4] sm:$0x1]
        %v1827 = vld [vmem:[#allocation2 + $0xc] sm:$0x1]
        %v1828 = vld [vmem:[#allocation2 + $0x14] sm:$0x1]
        %v1829 = vld [vmem:[#allocation2 + $0x1c] sm:$0x1]
        %v1830 = vld [vmem:[#allocation2 + $0x24] sm:$0x1]
        %v1831 = vld [vmem:[#allocation2 + $0x2c] sm:$0x1]
        %v1832 = vld [vmem:[#allocation2 + $0x34] sm:$0x1]
        %v1833 = vld [vmem:[#allocation2 + $0x3c] sm:$0x1]
        %v1834 = vld [vmem:[#allocation2] sm:$0xe]
        %v1835 = vld [vmem:[#allocation2 + $0x8] sm:$0xe]
        %v1836 = vld [vmem:[#allocation2 + $0x10] sm:$0xe]
        %v1837 = vld [vmem:[#allocation2 + $0x18] sm:$0xe]
        %v1838 = vld [vmem:[#allocation2 + $0x20] sm:$0xe]
        %v1839 = vld [vmem:[#allocation2 + $0x28] sm:$0xe]
        %v1840 = vld [vmem:[#allocation2 + $0x30] sm:$0xe]
        %v1841 = vld [vmem:[#allocation2 + $0x38] sm:$0xe]
        %v1858 = vunpack.c.l.b16 %v1818
        %v1859 = vunpack.c.l.b16 %v1826
        %v1860 = vunpack.c.l.b16 %v1819
        %v1861 = vunpack.c.l.b16 %v1827
        %v1862 = vunpack.c.l.b16 %v1820
        %v1863 = vunpack.c.l.b16 %v1828
        %v1864 = vunpack.c.l.b16 %v1821
        %v1865 = vunpack.c.l.b16 %v1829
        %v1866 = vunpack.c.l.b16 %v1822
        %v1867 = vunpack.c.l.b16 %v1830
        %v1868 = vunpack.c.l.b16 %v1823
        %v1869 = vunpack.c.l.b16 %v1831
        %v1870 = vunpack.c.l.b16 %v1824
        %v1871 = vunpack.c.l.b16 %v1832
        %v1872 = vunpack.c.l.b16 %v1825
        %v1873 = vunpack.c.l.b16 %v1833
        %v1874 = vpack.c.b16 %v1859, %v1858
        %v1875 = vpack.c.b16 %v1861, %v1860
        %v1876 = vpack.c.b16 %v1863, %v1862
        %v1877 = vpack.c.b16 %v1865, %v1864
        %v1878 = vpack.c.b16 %v1867, %v1866
        %v1879 = vpack.c.b16 %v1869, %v1868
        %v1880 = vpack.c.b16 %v1871, %v1870
        %v1881 = vpack.c.b16 %v1873, %v1872
        %v1883 = vshrl.u32 %v1874, 16
        %v1885 = vshll.u32 %v1874, 16
        %v1887 = vrot.slane %v1885, 1
        %v1888 = vor.u32 %v1883, %v1887
        %v1890 = vshrl.u32 %v1875, 16
        %v1892 = vshll.u32 %v1875, 16
        %v1894 = vrot.slane %v1892, 1
        %v1895 = vor.u32 %v1890, %v1894
        %v1897 = vshrl.u32 %v1876, 16
        %v1899 = vshll.u32 %v1876, 16
        %v1901 = vrot.slane %v1899, 1
        %v1902 = vor.u32 %v1897, %v1901
        %v1904 = vshrl.u32 %v1877, 16
        %v1906 = vshll.u32 %v1877, 16
        %v1908 = vrot.slane %v1906, 1
        %v1909 = vor.u32 %v1904, %v1908
        %v1911 = vshrl.u32 %v1878, 16
        %v1913 = vshll.u32 %v1878, 16
        %v1915 = vrot.slane %v1913, 1
        %v1916 = vor.u32 %v1911, %v1915
        %v1918 = vshrl.u32 %v1879, 16
        %v1920 = vshll.u32 %v1879, 16
        %v1922 = vrot.slane %v1920, 1
        %v1923 = vor.u32 %v1918, %v1922
        %v1925 = vshrl.u32 %v1880, 16
        %v1927 = vshll.u32 %v1880, 16
        %v1929 = vrot.slane %v1927, 1
        %v1930 = vor.u32 %v1925, %v1929
        %v1932 = vshrl.u32 %v1881, 16
        %v1934 = vshll.u32 %v1881, 16
        %v1936 = vrot.slane %v1934, 1
        %v1937 = vor.u32 %v1932, %v1936
        %1938 = vrot.lane.b32.xlu0 %v1888, 8
        %v1939 = vpop.permute.xlu0 %1938
        %1940 = vrot.lane.b32.xlu0 %v1895, 8
        %v1941 = vpop.permute.xlu0 %1940
        %1942 = vrot.lane.b32.xlu0 %v1902, 8
        %v1943 = vpop.permute.xlu0 %1942
        %1944 = vrot.lane.b32.xlu0 %v1909, 8
        %v1945 = vpop.permute.xlu0 %1944
        %1946 = vrot.lane.b32.xlu0 %v1916, 8
        %v1947 = vpop.permute.xlu0 %1946
        %1948 = vrot.lane.b32.xlu0 %v1923, 8
        %v1949 = vpop.permute.xlu0 %1948
        %1950 = vrot.lane.b32.xlu0 %v1930, 8
        %v1951 = vpop.permute.xlu0 %1950
        %1952 = vrot.lane.b32.xlu0 %v1937, 8
        %v1953 = vpop.permute.xlu0 %1952
        %v1962 = vunpack.c.l.b16 %v1834
        %v1963 = vunpack.c.l.b16 %v1835
        %v1964 = vunpack.c.l.b16 %v1836
        %v1965 = vunpack.c.l.b16 %v1837
        %v1966 = vunpack.c.l.b16 %v1838
        %v1967 = vunpack.c.l.b16 %v1839
        %v1968 = vunpack.c.l.b16 %v1840
        %v1969 = vunpack.c.l.b16 %v1841
        %v1970 = vpack.c.b16 %v1859, %v1962
        %v1971 = vpack.c.b16 %v1861, %v1963
        %v1972 = vpack.c.b16 %v1863, %v1964
        %v1973 = vpack.c.b16 %v1865, %v1965
        %v1974 = vpack.c.b16 %v1867, %v1966
        %v1975 = vpack.c.b16 %v1869, %v1967
        %v1976 = vpack.c.b16 %v1871, %v1968
        %v1977 = vpack.c.b16 %v1873, %v1969
        %v1978 = vrot.slane %v1970, 1
        %v1979 = vrot.slane %v1971, 1
        %v1980 = vrot.slane %v1972, 1
        %v1981 = vrot.slane %v1973, 1
        %v1982 = vrot.slane %v1974, 1
        %v1983 = vrot.slane %v1975, 1
        %v1984 = vrot.slane %v1976, 1
        %v1985 = vrot.slane %v1977, 1
        %1986 = vrot.lane.b32.xlu0 %v1978, 16
        %v1987 = vpop.permute.xlu0 %1986
        %1988 = vrot.lane.b32.xlu0 %v1979, 16
        %v1989 = vpop.permute.xlu0 %1988
        %1990 = vrot.lane.b32.xlu0 %v1980, 16
        %v1991 = vpop.permute.xlu0 %1990
        %1992 = vrot.lane.b32.xlu0 %v1981, 16
        %v1993 = vpop.permute.xlu0 %1992
        %1994 = vrot.lane.b32.xlu0 %v1982, 16
        %v1995 = vpop.permute.xlu0 %1994
        %1996 = vrot.lane.b32.xlu0 %v1983, 16
        %v1997 = vpop.permute.xlu0 %1996
        %1998 = vrot.lane.b32.xlu0 %v1984, 16
        %v1999 = vpop.permute.xlu0 %1998
        %2000 = vrot.lane.b32.xlu0 %v1985, 16
        %v2001 = vpop.permute.xlu0 %2000
        %v2004 = vsel %vm632, %v1818, %v1939
        %v2007 = vsel %vm632, %v1819, %v1941
        %v2010 = vsel %vm632, %v1820, %v1943
        %v2013 = vsel %vm632, %v1821, %v1945
        %v2016 = vsel %vm632, %v1822, %v1947
        %v2019 = vsel %vm632, %v1823, %v1949
        %v2022 = vsel %vm632, %v1824, %v1951
        %v2025 = vsel %vm632, %v1825, %v1953
        %vm2026 = vcmask 130048
        %v2028 = vsel %vm2026, %v2004, %v1987
        %v2030 = vsel %vm2026, %v2007, %v1989
        %v2032 = vsel %vm2026, %v2010, %v1991
        %v2034 = vsel %vm2026, %v2013, %v1993
        %v2036 = vsel %vm2026, %v2016, %v1995
        %v2038 = vsel %vm2026, %v2019, %v1997
        %v2040 = vsel %vm2026, %v2022, %v1999
        %v2042 = vsel %vm2026, %v2025, %v2001
        %v2043 = vld [vmem:[%s4] sm:$0xf]
        %v2044 = vld [vmem:[%s4 + $0x4] sm:$0xf]
        %v2045 = vld [vmem:[%s4 + $0x8] sm:$0xf]
        %s2046 = scalar_lea.vmem [#allocation2], 8
        %v2047 = vld [vmem:[%s2046] sm:$0xf]
        %v2048 = vld [vmem:[%s2046 + $0x8] sm:$0xf]
        %v2049 = vld [vmem:[%s2046 + $0x10] sm:$0xf]
        %v2050 = vld [vmem:[%s2046 + $0x18] sm:$0xf]
        %v2051 = vld [vmem:[%s2046 + $0x20] sm:$0xf]
        %v2052 = vld [vmem:[%s2046 + $0x28] sm:$0xf]
        %v2053 = vld [vmem:[%s2046 + $0x30] sm:$0xf]
        %v2054 = vld [vmem:[%s2046 + $0x38] sm:$0xf]
        %v2055 = vld [vmem:[%s2046 + $0x4] sm:$0x1]
        %v2056 = vld [vmem:[%s2046 + $0xc] sm:$0x1]
        %v2057 = vld [vmem:[%s2046 + $0x14] sm:$0x1]
        %v2058 = vld [vmem:[%s2046 + $0x1c] sm:$0x1]
        %v2059 = vld [vmem:[%s2046 + $0x24] sm:$0x1]
        %v2060 = vld [vmem:[%s2046 + $0x2c] sm:$0x1]
        %v2061 = vld [vmem:[%s2046 + $0x34] sm:$0x1]
        %v2062 = vld [vmem:[%s2046 + $0x3c] sm:$0x1]
        %v2063 = vld [vmem:[%s2046] sm:$0xe]
        %v2064 = vld [vmem:[%s2046 + $0x8] sm:$0xe]
        %v2065 = vld [vmem:[%s2046 + $0x10] sm:$0xe]
        %v2066 = vld [vmem:[%s2046 + $0x18] sm:$0xe]
        %v2067 = vld [vmem:[%s2046 + $0x20] sm:$0xe]
        %v2068 = vld [vmem:[%s2046 + $0x28] sm:$0xe]
        %v2069 = vld [vmem:[%s2046 + $0x30] sm:$0xe]
        %v2070 = vld [vmem:[%s2046 + $0x38] sm:$0xe]
        %v2087 = vunpack.c.l.b16 %v2047
        %v2088 = vunpack.c.l.b16 %v2055
        %v2089 = vunpack.c.l.b16 %v2048
        %v2090 = vunpack.c.l.b16 %v2056
        %v2091 = vunpack.c.l.b16 %v2049
        %v2092 = vunpack.c.l.b16 %v2057
        %v2093 = vunpack.c.l.b16 %v2050
        %v2094 = vunpack.c.l.b16 %v2058
        %v2095 = vunpack.c.l.b16 %v2051
        %v2096 = vunpack.c.l.b16 %v2059
        %v2097 = vunpack.c.l.b16 %v2052
        %v2098 = vunpack.c.l.b16 %v2060
        %v2099 = vunpack.c.l.b16 %v2053
        %v2100 = vunpack.c.l.b16 %v2061
        %v2101 = vunpack.c.l.b16 %v2054
        %v2102 = vunpack.c.l.b16 %v2062
        %v2103 = vpack.c.b16 %v2088, %v2087
        %v2104 = vpack.c.b16 %v2090, %v2089
        %v2105 = vpack.c.b16 %v2092, %v2091
        %v2106 = vpack.c.b16 %v2094, %v2093
        %v2107 = vpack.c.b16 %v2096, %v2095
        %v2108 = vpack.c.b16 %v2098, %v2097
        %v2109 = vpack.c.b16 %v2100, %v2099
        %v2110 = vpack.c.b16 %v2102, %v2101
        %v2112 = vshrl.u32 %v2103, 16
        %v2114 = vshll.u32 %v2103, 16
        %v2116 = vrot.slane %v2114, 1
        %v2117 = vor.u32 %v2112, %v2116
        %v2119 = vshrl.u32 %v2104, 16
        %v2121 = vshll.u32 %v2104, 16
        %v2123 = vrot.slane %v2121, 1
        %v2124 = vor.u32 %v2119, %v2123
        %v2126 = vshrl.u32 %v2105, 16
        %v2128 = vshll.u32 %v2105, 16
        %v2130 = vrot.slane %v2128, 1
        %v2131 = vor.u32 %v2126, %v2130
        %v2133 = vshrl.u32 %v2106, 16
        %v2135 = vshll.u32 %v2106, 16
        %v2137 = vrot.slane %v2135, 1
        %v2138 = vor.u32 %v2133, %v2137
        %v2140 = vshrl.u32 %v2107, 16
        %v2142 = vshll.u32 %v2107, 16
        %v2144 = vrot.slane %v2142, 1
        %v2145 = vor.u32 %v2140, %v2144
        %v2147 = vshrl.u32 %v2108, 16
        %v2149 = vshll.u32 %v2108, 16
        %v2151 = vrot.slane %v2149, 1
        %v2152 = vor.u32 %v2147, %v2151
        %v2154 = vshrl.u32 %v2109, 16
        %v2156 = vshll.u32 %v2109, 16
        %v2158 = vrot.slane %v2156, 1
        %v2159 = vor.u32 %v2154, %v2158
        %v2161 = vshrl.u32 %v2110, 16
        %v2163 = vshll.u32 %v2110, 16
        %v2165 = vrot.slane %v2163, 1
        %v2166 = vor.u32 %v2161, %v2165
        %2167 = vrot.lane.b32.xlu0 %v2117, 8
        %v2168 = vpop.permute.xlu0 %2167
        %2169 = vrot.lane.b32.xlu0 %v2124, 8
        %v2170 = vpop.permute.xlu0 %2169
        %2171 = vrot.lane.b32.xlu0 %v2131, 8
        %v2172 = vpop.permute.xlu0 %2171
        %2173 = vrot.lane.b32.xlu0 %v2138, 8
        %v2174 = vpop.permute.xlu0 %2173
        %2175 = vrot.lane.b32.xlu0 %v2145, 8
        %v2176 = vpop.permute.xlu0 %2175
        %2177 = vrot.lane.b32.xlu0 %v2152, 8
        %v2178 = vpop.permute.xlu0 %2177
        %2179 = vrot.lane.b32.xlu0 %v2159, 8
        %v2180 = vpop.permute.xlu0 %2179
        %2181 = vrot.lane.b32.xlu0 %v2166, 8
        %v2182 = vpop.permute.xlu0 %2181
        %v2191 = vunpack.c.l.b16 %v2063
        %v2192 = vunpack.c.l.b16 %v2064
        %v2193 = vunpack.c.l.b16 %v2065
        %v2194 = vunpack.c.l.b16 %v2066
        %v2195 = vunpack.c.l.b16 %v2067
        %v2196 = vunpack.c.l.b16 %v2068
        %v2197 = vunpack.c.l.b16 %v2069
        %v2198 = vunpack.c.l.b16 %v2070
        %v2199 = vpack.c.b16 %v2088, %v2191
        %v2200 = vpack.c.b16 %v2090, %v2192
        %v2201 = vpack.c.b16 %v2092, %v2193
        %v2202 = vpack.c.b16 %v2094, %v2194
        %v2203 = vpack.c.b16 %v2096, %v2195
        %v2204 = vpack.c.b16 %v2098, %v2196
        %v2205 = vpack.c.b16 %v2100, %v2197
        %v2206 = vpack.c.b16 %v2102, %v2198
        %v2207 = vrot.slane %v2199, 1
        %v2208 = vrot.slane %v2200, 1
        %v2209 = vrot.slane %v2201, 1
        %v2210 = vrot.slane %v2202, 1
        %v2211 = vrot.slane %v2203, 1
        %v2212 = vrot.slane %v2204, 1
        %v2213 = vrot.slane %v2205, 1
        %v2214 = vrot.slane %v2206, 1
        %2215 = vrot.lane.b32.xlu0 %v2207, 16
        %v2216 = vpop.permute.xlu0 %2215
        %2217 = vrot.lane.b32.xlu0 %v2208, 16
        %v2218 = vpop.permute.xlu0 %2217
        %2219 = vrot.lane.b32.xlu0 %v2209, 16
        %v2220 = vpop.permute.xlu0 %2219
        %2221 = vrot.lane.b32.xlu0 %v2210, 16
        %v2222 = vpop.permute.xlu0 %2221
        %2223 = vrot.lane.b32.xlu0 %v2211, 16
        %v2224 = vpop.permute.xlu0 %2223
        %2225 = vrot.lane.b32.xlu0 %v2212, 16
        %v2226 = vpop.permute.xlu0 %2225
        %2227 = vrot.lane.b32.xlu0 %v2213, 16
        %v2228 = vpop.permute.xlu0 %2227
        %2229 = vrot.lane.b32.xlu0 %v2214, 16
        %v2230 = vpop.permute.xlu0 %2229
        %v2233 = vsel %vm632, %v2047, %v2168
        %v2236 = vsel %vm632, %v2048, %v2170
        %v2239 = vsel %vm632, %v2049, %v2172
        %v2242 = vsel %vm632, %v2050, %v2174
        %v2245 = vsel %vm632, %v2051, %v2176
        %v2248 = vsel %vm632, %v2052, %v2178
        %v2251 = vsel %vm632, %v2053, %v2180
        %v2254 = vsel %vm632, %v2054, %v2182
        %v2256 = vsel %vm2026, %v2233, %v2216
        %v2258 = vsel %vm2026, %v2236, %v2218
        %v2260 = vsel %vm2026, %v2239, %v2220
        %v2262 = vsel %vm2026, %v2242, %v2222
        %v2264 = vsel %vm2026, %v2245, %v2224
        %v2266 = vsel %vm2026, %v2248, %v2226
        %v2268 = vsel %vm2026, %v2251, %v2228
        %v2270 = vsel %vm2026, %v2254, %v2230
        %s2271 = scalar_lea.vmem %s4, 12
        %v2272 = vld [vmem:[%s2271] sm:$0xf]
        %v2273 = vld [vmem:[%s2271 + $0x4] sm:$0xf]
        %v2274 = vld [vmem:[%s2271 + $0x8] sm:$0xf]
        %v2283 = vunpack.c.l.b16 %v2256
        %v2284 = vunpack.c.l.b16 %v2258
        %v2285 = vunpack.c.l.b16 %v2260
        %v2286 = vunpack.c.l.b16 %v2262
        %v2287 = vunpack.c.l.b16 %v2264
        %v2288 = vunpack.c.l.b16 %v2266
        %v2289 = vunpack.c.l.b16 %v2268
        %v2290 = vunpack.c.l.b16 %v2270
        %v2291 = vpack.c.b16 %v2284, %v2283
        %v2292 = vpack.c.b16 %v2286, %v2285
        %v2293 = vpack.c.b16 %v2288, %v2287
        %v2294 = vpack.c.b16 %v2290, %v2289
        %v2298 = vunpack.c.l.b16 %v2272
        %v2299 = vunpack.c.l.b16 %v2273
        %v2300 = vunpack.c.l.b16 %v2274
        %v2301 = vpack.c.b16 %v2299, %v2298
        %v2302 = vpack.c.b16 %v2300, %v2300
        %vm2304 = vcmask 195584
        %v2306 = vsel %vm2304, %v2291, 0
        %v2309 = vsel %vm2304, %v2292, 0
        %v2312 = vsel %vm2304, %v2293, 0
        %v2315 = vsel %vm2304, %v2294, 0
        %vm2317 = vcmask 1043456
        %v2319 = vsel %vm2317, %v2302, 0
        %2321 = vmatpush.bf16.msra.mxu0 0
        %2322 = vmatpush.bf16.msra.mxu0 0
        %2323 = vmatpush.bf16.msra.mxu0 0
        %2324 = vmatpush.bf16.msra.mxu0 0
        %2325 = vmatpush.bf16.msra.mxu0 0
        %2326 = vmatpush.bf16.msra.mxu0 0
        %2327 = vmatpush.bf16.msra.mxu0 %v2319
        %2328 = vmatpush.bf16.msra.mxu0 %v2301
        %2329 = vmatmul.bf16.gmra.mxu0 %v2306
        %v2330 = vpop.f32.mrf.mxu0
        %v2331 = vadd.f32 0.0, %v2330
        %v2332 = vpop.f32.mrf.mxu0
        %v2333 = vadd.f32 0.0, %v2332
        %2334 = vmatmul.bf16.gmra.mxu0 %v2309
        %v2335 = vpop.f32.mrf.mxu0
        %v2336 = vadd.f32 0.0, %v2335
        %v2337 = vpop.f32.mrf.mxu0
        %v2338 = vadd.f32 0.0, %v2337
        %2339 = vmatmul.bf16.gmra.mxu0 %v2312
        %v2340 = vpop.f32.mrf.mxu0
        %v2341 = vadd.f32 0.0, %v2340
        %v2342 = vpop.f32.mrf.mxu0
        %v2343 = vadd.f32 0.0, %v2342
        %2344 = vmatmul.bf16.gmra.mxu0 %v2315
        %v2345 = vpop.f32.mrf.mxu0
        %v2346 = vadd.f32 0.0, %v2345
        %v2347 = vpop.f32.mrf.mxu0
        %v2348 = vadd.f32 0.0, %v2347
        %2349 = vdwg.mxu0
        %v2358 = vunpack.c.l.b16 %v2028
        %v2359 = vunpack.c.l.b16 %v2030
        %v2360 = vunpack.c.l.b16 %v2032
        %v2361 = vunpack.c.l.b16 %v2034
        %v2362 = vunpack.c.l.b16 %v2036
        %v2363 = vunpack.c.l.b16 %v2038
        %v2364 = vunpack.c.l.b16 %v2040
        %v2365 = vunpack.c.l.b16 %v2042
        %v2366 = vpack.c.b16 %v2359, %v2358
        %v2367 = vpack.c.b16 %v2361, %v2360
        %v2368 = vpack.c.b16 %v2363, %v2362
        %v2369 = vpack.c.b16 %v2365, %v2364
        %v2373 = vunpack.c.l.b16 %v2043
        %v2374 = vunpack.c.l.b16 %v2044
        %v2375 = vunpack.c.l.b16 %v2045
        %v2376 = vpack.c.b16 %v2374, %v2373
        %v2377 = vpack.c.b16 %v2375, %v2375
        %v2380 = vsel %vm2304, %v2366, 0
        %v2383 = vsel %vm2304, %v2367, 0
        %v2386 = vsel %vm2304, %v2368, 0
        %v2389 = vsel %vm2304, %v2369, 0
        %v2392 = vsel %vm2317, %v2377, 0
        %2394 = vmatpush.bf16.msra.mxu0 0
        %2395 = vmatpush.bf16.msra.mxu0 0
        %2396 = vmatpush.bf16.msra.mxu0 0
        %2397 = vmatpush.bf16.msra.mxu0 0
        %2398 = vmatpush.bf16.msra.mxu0 0
        %2399 = vmatpush.bf16.msra.mxu0 0
        %2400 = vmatpush.bf16.msra.mxu0 %v2392
        %2401 = vmatpush.bf16.msra.mxu0 %v2376
        %2402 = vmatmul.bf16.gmra.mxu0 %v2380
        %v2403 = vpop.f32.mrf.mxu0
        %v2404 = vadd.f32 %v2331, %v2403
        %v2405 = vpop.f32.mrf.mxu0
        %v2406 = vadd.f32 %v2333, %v2405
        %2407 = vmatmul.bf16.gmra.mxu0 %v2383
        %v2408 = vpop.f32.mrf.mxu0
        %v2409 = vadd.f32 %v2336, %v2408
        %v2410 = vpop.f32.mrf.mxu0
        %v2411 = vadd.f32 %v2338, %v2410
        %2412 = vmatmul.bf16.gmra.mxu0 %v2386
        %v2413 = vpop.f32.mrf.mxu0
        %v2414 = vadd.f32 %v2341, %v2413
        %v2415 = vpop.f32.mrf.mxu0
        %v2416 = vadd.f32 %v2343, %v2415
        %2417 = vmatmul.bf16.gmra.mxu0 %v2389
        %v2418 = vpop.f32.mrf.mxu0
        %v2419 = vadd.f32 %v2346, %v2418
        %v2420 = vpop.f32.mrf.mxu0
        %v2421 = vadd.f32 %v2348, %v2420
        %2422 = vdwg.mxu0
        %s2423 = scalar_lea.vmem [#allocation2], 16
        %v2424 = vld [vmem:[%s2423] sm:$0xf]
        %v2425 = vld [vmem:[%s2423 + $0x8] sm:$0xf]
        %v2426 = vld [vmem:[%s2423 + $0x10] sm:$0xf]
        %v2427 = vld [vmem:[%s2423 + $0x18] sm:$0xf]
        %v2428 = vld [vmem:[%s2423 + $0x20] sm:$0xf]
        %v2429 = vld [vmem:[%s2423 + $0x28] sm:$0xf]
        %v2430 = vld [vmem:[%s2423 + $0x30] sm:$0xf]
        %v2431 = vld [vmem:[%s2423 + $0x38] sm:$0xf]
        %v2432 = vld [vmem:[%s2423 + $0x4] sm:$0x1]
        %v2433 = vld [vmem:[%s2423 + $0xc] sm:$0x1]
        %v2434 = vld [vmem:[%s2423 + $0x14] sm:$0x1]
        %v2435 = vld [vmem:[%s2423 + $0x1c] sm:$0x1]
        %v2436 = vld [vmem:[%s2423 + $0x24] sm:$0x1]
        %v2437 = vld [vmem:[%s2423 + $0x2c] sm:$0x1]
        %v2438 = vld [vmem:[%s2423 + $0x34] sm:$0x1]
        %v2439 = vld [vmem:[%s2423 + $0x3c] sm:$0x1]
        %v2440 = vld [vmem:[%s2423] sm:$0xe]
        %v2441 = vld [vmem:[%s2423 + $0x8] sm:$0xe]
        %v2442 = vld [vmem:[%s2423 + $0x10] sm:$0xe]
        %v2443 = vld [vmem:[%s2423 + $0x18] sm:$0xe]
        %v2444 = vld [vmem:[%s2423 + $0x20] sm:$0xe]
        %v2445 = vld [vmem:[%s2423 + $0x28] sm:$0xe]
        %v2446 = vld [vmem:[%s2423 + $0x30] sm:$0xe]
        %v2447 = vld [vmem:[%s2423 + $0x38] sm:$0xe]
        %v2464 = vunpack.c.l.b16 %v2424
        %v2465 = vunpack.c.l.b16 %v2432
        %v2466 = vunpack.c.l.b16 %v2425
        %v2467 = vunpack.c.l.b16 %v2433
        %v2468 = vunpack.c.l.b16 %v2426
        %v2469 = vunpack.c.l.b16 %v2434
        %v2470 = vunpack.c.l.b16 %v2427
        %v2471 = vunpack.c.l.b16 %v2435
        %v2472 = vunpack.c.l.b16 %v2428
        %v2473 = vunpack.c.l.b16 %v2436
        %v2474 = vunpack.c.l.b16 %v2429
        %v2475 = vunpack.c.l.b16 %v2437
        %v2476 = vunpack.c.l.b16 %v2430
        %v2477 = vunpack.c.l.b16 %v2438
        %v2478 = vunpack.c.l.b16 %v2431
        %v2479 = vunpack.c.l.b16 %v2439
        %v2480 = vpack.c.b16 %v2465, %v2464
        %v2481 = vpack.c.b16 %v2467, %v2466
        %v2482 = vpack.c.b16 %v2469, %v2468
        %v2483 = vpack.c.b16 %v2471, %v2470
        %v2484 = vpack.c.b16 %v2473, %v2472
        %v2485 = vpack.c.b16 %v2475, %v2474
        %v2486 = vpack.c.b16 %v2477, %v2476
        %v2487 = vpack.c.b16 %v2479, %v2478
        %v2489 = vshrl.u32 %v2480, 16
        %v2491 = vshll.u32 %v2480, 16
        %v2493 = vrot.slane %v2491, 1
        %v2494 = vor.u32 %v2489, %v2493
        %v2496 = vshrl.u32 %v2481, 16
        %v2498 = vshll.u32 %v2481, 16
        %v2500 = vrot.slane %v2498, 1
        %v2501 = vor.u32 %v2496, %v2500
        %v2503 = vshrl.u32 %v2482, 16
        %v2505 = vshll.u32 %v2482, 16
        %v2507 = vrot.slane %v2505, 1
        %v2508 = vor.u32 %v2503, %v2507
        %v2510 = vshrl.u32 %v2483, 16
        %v2512 = vshll.u32 %v2483, 16
        %v2514 = vrot.slane %v2512, 1
        %v2515 = vor.u32 %v2510, %v2514
        %v2517 = vshrl.u32 %v2484, 16
        %v2519 = vshll.u32 %v2484, 16
        %v2521 = vrot.slane %v2519, 1
        %v2522 = vor.u32 %v2517, %v2521
        %v2524 = vshrl.u32 %v2485, 16
        %v2526 = vshll.u32 %v2485, 16
        %v2528 = vrot.slane %v2526, 1
        %v2529 = vor.u32 %v2524, %v2528
        %v2531 = vshrl.u32 %v2486, 16
        %v2533 = vshll.u32 %v2486, 16
        %v2535 = vrot.slane %v2533, 1
        %v2536 = vor.u32 %v2531, %v2535
        %v2538 = vshrl.u32 %v2487, 16
        %v2540 = vshll.u32 %v2487, 16
        %v2542 = vrot.slane %v2540, 1
        %v2543 = vor.u32 %v2538, %v2542
        %2544 = vrot.lane.b32.xlu0 %v2494, 8
        %v2545 = vpop.permute.xlu0 %2544
        %2546 = vrot.lane.b32.xlu0 %v2501, 8
        %v2547 = vpop.permute.xlu0 %2546
        %2548 = vrot.lane.b32.xlu0 %v2508, 8
        %v2549 = vpop.permute.xlu0 %2548
        %2550 = vrot.lane.b32.xlu0 %v2515, 8
        %v2551 = vpop.permute.xlu0 %2550
        %2552 = vrot.lane.b32.xlu0 %v2522, 8
        %v2553 = vpop.permute.xlu0 %2552
        %2554 = vrot.lane.b32.xlu0 %v2529, 8
        %v2555 = vpop.permute.xlu0 %2554
        %2556 = vrot.lane.b32.xlu0 %v2536, 8
        %v2557 = vpop.permute.xlu0 %2556
        %2558 = vrot.lane.b32.xlu0 %v2543, 8
        %v2559 = vpop.permute.xlu0 %2558
        %v2568 = vunpack.c.l.b16 %v2440
        %v2569 = vunpack.c.l.b16 %v2441
        %v2570 = vunpack.c.l.b16 %v2442
        %v2571 = vunpack.c.l.b16 %v2443
        %v2572 = vunpack.c.l.b16 %v2444
        %v2573 = vunpack.c.l.b16 %v2445
        %v2574 = vunpack.c.l.b16 %v2446
        %v2575 = vunpack.c.l.b16 %v2447
        %v2576 = vpack.c.b16 %v2465, %v2568
        %v2577 = vpack.c.b16 %v2467, %v2569
        %v2578 = vpack.c.b16 %v2469, %v2570
        %v2579 = vpack.c.b16 %v2471, %v2571
        %v2580 = vpack.c.b16 %v2473, %v2572
        %v2581 = vpack.c.b16 %v2475, %v2573
        %v2582 = vpack.c.b16 %v2477, %v2574
        %v2583 = vpack.c.b16 %v2479, %v2575
        %v2584 = vrot.slane %v2576, 1
        %v2585 = vrot.slane %v2577, 1
        %v2586 = vrot.slane %v2578, 1
        %v2587 = vrot.slane %v2579, 1
        %v2588 = vrot.slane %v2580, 1
        %v2589 = vrot.slane %v2581, 1
        %v2590 = vrot.slane %v2582, 1
        %v2591 = vrot.slane %v2583, 1
        %2592 = vrot.lane.b32.xlu0 %v2584, 16
        %v2593 = vpop.permute.xlu0 %2592
        %2594 = vrot.lane.b32.xlu0 %v2585, 16
        %v2595 = vpop.permute.xlu0 %2594
        %2596 = vrot.lane.b32.xlu0 %v2586, 16
        %v2597 = vpop.permute.xlu0 %2596
        %2598 = vrot.lane.b32.xlu0 %v2587, 16
        %v2599 = vpop.permute.xlu0 %2598
        %2600 = vrot.lane.b32.xlu0 %v2588, 16
        %v2601 = vpop.permute.xlu0 %2600
        %2602 = vrot.lane.b32.xlu0 %v2589, 16
        %v2603 = vpop.permute.xlu0 %2602
        %2604 = vrot.lane.b32.xlu0 %v2590, 16
        %v2605 = vpop.permute.xlu0 %2604
        %2606 = vrot.lane.b32.xlu0 %v2591, 16
        %v2607 = vpop.permute.xlu0 %2606
        %v2610 = vsel %vm632, %v2424, %v2545
        %v2613 = vsel %vm632, %v2425, %v2547
        %v2616 = vsel %vm632, %v2426, %v2549
        %v2619 = vsel %vm632, %v2427, %v2551
        %v2622 = vsel %vm632, %v2428, %v2553
        %v2625 = vsel %vm632, %v2429, %v2555
        %v2628 = vsel %vm632, %v2430, %v2557
        %v2631 = vsel %vm632, %v2431, %v2559
        %v2633 = vsel %vm2026, %v2610, %v2593
        %v2635 = vsel %vm2026, %v2613, %v2595
        %v2637 = vsel %vm2026, %v2616, %v2597
        %v2639 = vsel %vm2026, %v2619, %v2599
        %v2641 = vsel %vm2026, %v2622, %v2601
        %v2643 = vsel %vm2026, %v2625, %v2603
        %v2645 = vsel %vm2026, %v2628, %v2605
        %v2647 = vsel %vm2026, %v2631, %v2607
        %s2648 = scalar_lea.vmem %s4, 24
        %v2649 = vld [vmem:[%s2648] sm:$0xf]
        %v2650 = vld [vmem:[%s2648 + $0x4] sm:$0xf]
        %v2651 = vld [vmem:[%s2648 + $0x8] sm:$0xf]
        %v2660 = vunpack.c.l.b16 %v2633
        %v2661 = vunpack.c.l.b16 %v2635
        %v2662 = vunpack.c.l.b16 %v2637
        %v2663 = vunpack.c.l.b16 %v2639
        %v2664 = vunpack.c.l.b16 %v2641
        %v2665 = vunpack.c.l.b16 %v2643
        %v2666 = vunpack.c.l.b16 %v2645
        %v2667 = vunpack.c.l.b16 %v2647
        %v2668 = vpack.c.b16 %v2661, %v2660
        %v2669 = vpack.c.b16 %v2663, %v2662
        %v2670 = vpack.c.b16 %v2665, %v2664
        %v2671 = vpack.c.b16 %v2667, %v2666
        %v2675 = vunpack.c.l.b16 %v2649
        %v2676 = vunpack.c.l.b16 %v2650
        %v2677 = vunpack.c.l.b16 %v2651
        %v2678 = vpack.c.b16 %v2676, %v2675
        %v2679 = vpack.c.b16 %v2677, %v2677
        %v2682 = vsel %vm2304, %v2668, 0
        %v2685 = vsel %vm2304, %v2669, 0
        %v2688 = vsel %vm2304, %v2670, 0
        %v2691 = vsel %vm2304, %v2671, 0
        %v2694 = vsel %vm2317, %v2679, 0
        %2696 = vmatpush.bf16.msra.mxu0 0
        %2697 = vmatpush.bf16.msra.mxu0 0
        %2698 = vmatpush.bf16.msra.mxu0 0
        %2699 = vmatpush.bf16.msra.mxu0 0
        %2700 = vmatpush.bf16.msra.mxu0 0
        %2701 = vmatpush.bf16.msra.mxu0 0
        %2702 = vmatpush.bf16.msra.mxu0 %v2694
        %2703 = vmatpush.bf16.msra.mxu0 %v2678
        %2704 = vmatmul.bf16.gmra.mxu0 %v2682
        %v2705 = vpop.f32.mrf.mxu0
        %v2706 = vadd.f32 0.0, %v2705
        %v2707 = vpop.f32.mrf.mxu0
        %v2708 = vadd.f32 0.0, %v2707
        %2709 = vmatmul.bf16.gmra.mxu0 %v2685
        %v2710 = vpop.f32.mrf.mxu0
        %v2711 = vadd.f32 0.0, %v2710
        %v2712 = vpop.f32.mrf.mxu0
        %v2713 = vadd.f32 0.0, %v2712
        %2714 = vmatmul.bf16.gmra.mxu0 %v2688
        %v2715 = vpop.f32.mrf.mxu0
        %v2716 = vadd.f32 0.0, %v2715
        %v2717 = vpop.f32.mrf.mxu0
        %v2718 = vadd.f32 0.0, %v2717
        %2719 = vmatmul.bf16.gmra.mxu0 %v2691
        %v2720 = vpop.f32.mrf.mxu0
        %v2721 = vadd.f32 0.0, %v2720
        %v2722 = vpop.f32.mrf.mxu0
        %v2723 = vadd.f32 0.0, %v2722
        %2724 = vdwg.mxu0
        %v2725 = vadd.f32 %v2404, %v2706
        %v2726 = vadd.f32 %v2406, %v2708
        %v2727 = vadd.f32 %v2409, %v2711
        %v2728 = vadd.f32 %v2411, %v2713
        %v2729 = vadd.f32 %v2414, %v2716
        %v2730 = vadd.f32 %v2416, %v2718
        %v2731 = vadd.f32 %v2419, %v2721
        %v2732 = vadd.f32 %v2421, %v2723
        %v2733 = vld [vmem:[%s5] sm:$0x1]
        %v2735 = vperm.slane %v2733, 0
        %v2737 = vmul.f32 %v2725, %v2735
        %v2738 = vmul.f32 %v2726, %v2735
        %v2739 = vmul.f32 %v2727, %v2735
        %v2740 = vmul.f32 %v2728, %v2735
        %v2741 = vmul.f32 %v2729, %v2735
        %v2742 = vmul.f32 %v2730, %v2735
        %v2743 = vmul.f32 %v2731, %v2735
        %v2744 = vmul.f32 %v2732, %v2735
        %v2745 = vld [vmem:[%s6] sm:$0x1]
        %v2747 = vperm.slane %v2745, 0
        %v2749 = vadd.f32 %v2737, %v2747
        %v2750 = vadd.f32 %v2738, %v2747
        %v2751 = vadd.f32 %v2739, %v2747
        %v2752 = vadd.f32 %v2740, %v2747
        %v2753 = vadd.f32 %v2741, %v2747
        %v2754 = vadd.f32 %v2742, %v2747
        %v2755 = vadd.f32 %v2743, %v2747
        %v2756 = vadd.f32 %v2744, %v2747
        %s2757 = sadd.s32 %s1101, 66
        %s2758 = smul.addr %s2757, 4
        %s2759 = scalar_lea.vmem %s371, %s2758
        %v2760 = vld [vmem:[%s2759] sm:$0xf]
        %v2761 = vld [vmem:[%s2759 + $0x8] sm:$0xf]
        %v2762 = vld [vmem:[%s2759 + $0x10] sm:$0xf]
        %v2763 = vld [vmem:[%s2759 + $0x18] sm:$0xf]
        %v2764 = vld [vmem:[%s2759 + $0x20] sm:$0xf]
        %v2765 = vld [vmem:[%s2759 + $0x28] sm:$0xf]
        %v2766 = vld [vmem:[%s2759 + $0x30] sm:$0xf]
        %v2767 = vld [vmem:[%s2759 + $0x38] sm:$0xf]
        %v2768 = vld [vmem:[%s7] sm:$0x3]
        %v2777 = vunpack.c.l.b16 %v2760
        %v2778 = vunpack.c.l.b16 %v2761
        %v2779 = vunpack.c.l.b16 %v2762
        %v2780 = vunpack.c.l.b16 %v2763
        %v2781 = vunpack.c.l.b16 %v2764
        %v2782 = vunpack.c.l.b16 %v2765
        %v2783 = vunpack.c.l.b16 %v2766
        %v2784 = vunpack.c.l.b16 %v2767
        %v2785 = vpack.c.b16 %v2778, %v2777
        %v2786 = vpack.c.b16 %v2780, %v2779
        %v2787 = vpack.c.b16 %v2782, %v2781
        %v2788 = vpack.c.b16 %v2784, %v2783
        %v2790 = vsel %vm601, %v2785, 0
        %v2793 = vsel %vm601, %v2786, 0
        %v2796 = vsel %vm601, %v2787, 0
        %v2799 = vsel %vm601, %v2788, 0
        %vm2801 = vcmask 1041408
        %v2803 = vsel %vm2801, %v2768, 0
        %2805 = vmatpush.bf16.msra.mxu0 0
        %2806 = vmatpush.bf16.msra.mxu0 0
        %2807 = vmatpush.bf16.msra.mxu0 0
        %2808 = vmatpush.bf16.msra.mxu0 0
        %2809 = vmatpush.bf16.msra.mxu0 0
        %2810 = vmatpush.bf16.msra.mxu0 0
        %2811 = vmatpush.bf16.msra.mxu0 0
        %2812 = vmatpush.bf16.msra.mxu0 %v2803
        %2813 = vmatmul.bf16.gmra.mxu0 %v2790
        %v2814 = vpop.f32.mrf.mxu0
        %v2815 = vadd.f32 0.0, %v2814
        %v2816 = vpop.f32.mrf.mxu0
        %v2817 = vadd.f32 0.0, %v2816
        %2818 = vmatmul.bf16.gmra.mxu0 %v2793
        %v2819 = vpop.f32.mrf.mxu0
        %v2820 = vadd.f32 0.0, %v2819
        %v2821 = vpop.f32.mrf.mxu0
        %v2822 = vadd.f32 0.0, %v2821
        %2823 = vmatmul.bf16.gmra.mxu0 %v2796
        %v2824 = vpop.f32.mrf.mxu0
        %v2825 = vadd.f32 0.0, %v2824
        %v2826 = vpop.f32.mrf.mxu0
        %v2827 = vadd.f32 0.0, %v2826
        %2828 = vmatmul.bf16.gmra.mxu0 %v2799
        %v2829 = vpop.f32.mrf.mxu0
        %v2830 = vadd.f32 0.0, %v2829
        %v2831 = vpop.f32.mrf.mxu0
        %v2832 = vadd.f32 0.0, %v2831
        %2833 = vdwg.mxu0
        %v2834 = vld [vmem:[%s8] sm:$0x1]
        %v2836 = vperm.slane %v2834, 0
        %v2838 = vmul.f32 %v2815, %v2836
        %v2839 = vmul.f32 %v2817, %v2836
        %v2840 = vmul.f32 %v2820, %v2836
        %v2841 = vmul.f32 %v2822, %v2836
        %v2842 = vmul.f32 %v2825, %v2836
        %v2843 = vmul.f32 %v2827, %v2836
        %v2844 = vmul.f32 %v2830, %v2836
        %v2845 = vmul.f32 %v2832, %v2836
        %v2846 = vld [vmem:[%s9] sm:$0x1]
        %v2848 = vperm.slane %v2846, 0
        %v2850 = vadd.f32 %v2838, %v2848
        %v2851 = vadd.f32 %v2839, %v2848
        %v2852 = vadd.f32 %v2840, %v2848
        %v2853 = vadd.f32 %v2841, %v2848
        %v2854 = vadd.f32 %v2842, %v2848
        %v2855 = vadd.f32 %v2843, %v2848
        %v2856 = vadd.f32 %v2844, %v2848
        %v2857 = vadd.f32 %v2845, %v2848
        %v2858 = vadd.f32 %v2749, %v2850
        %v2859 = vadd.f32 %v2750, %v2851
        %v2860 = vadd.f32 %v2751, %v2852
        %v2861 = vadd.f32 %v2752, %v2853
        %v2862 = vadd.f32 %v2753, %v2854
        %v2863 = vadd.f32 %v2754, %v2855
        %v2864 = vadd.f32 %v2755, %v2856
        %v2865 = vadd.f32 %v2756, %v2857
        %v2866 = vmax.f32 %v2858, 0.0
        %v2867 = vmax.f32 %v2859, 0.0
        %v2868 = vmax.f32 %v2860, 0.0
        %v2869 = vmax.f32 %v2861, 0.0
        %v2870 = vmax.f32 %v2862, 0.0
        %v2871 = vmax.f32 %v2863, 0.0
        %v2872 = vmax.f32 %v2864, 0.0
        %v2873 = vmax.f32 %v2865, 0.0
        %v2874 = vpack.c.bf16 %v2866, %v2866
        %v2875 = vpack.c.bf16 %v2867, %v2867
        %v2876 = vpack.c.bf16 %v2868, %v2868
        %v2877 = vpack.c.bf16 %v2869, %v2869
        %v2878 = vpack.c.bf16 %v2870, %v2870
        %v2879 = vpack.c.bf16 %v2871, %v2871
        %v2880 = vpack.c.bf16 %v2872, %v2872
        %v2881 = vpack.c.bf16 %v2873, %v2873
        %vm2882 = vcmask 60416
        %2883 = vst.msk [vmem:[%s366] sm:$0xf] %vm2882, %v2874
        %2884 = vst.msk [vmem:[%s366 + $0x4] sm:$0xf] %vm2882, %v2875
        %2885 = vst.msk [vmem:[%s366 + $0x8] sm:$0xf] %vm2882, %v2876
        %2886 = vst.msk [vmem:[%s366 + $0xc] sm:$0xf] %vm2882, %v2877
        %2887 = vst.msk [vmem:[%s366 + $0x10] sm:$0xf] %vm2882, %v2878
        %2888 = vst.msk [vmem:[%s366 + $0x14] sm:$0xf] %vm2882, %v2879
        %2889 = vst.msk [vmem:[%s366 + $0x18] sm:$0xf] %vm2882, %v2880
        %2890 = vst.msk [vmem:[%s366 + $0x1c] sm:$0xf] %vm2882, %v2881
        %s2891 = sand.u32 %s261, 1
        %s2892 = scalar_lea.sflag [#allocation4], %s2891
        %s2893 = sand.u32 %s261, 1
        %s2894 = smul.addr %s2893, 32
        %s2895 = scalar_lea.vmem [#allocation3], %s2894
        // Predicated region
        $region61: #{resblk_forward.1} parent=59 // pred_check
          %p2896 = pneg %p271
        $region62: #{resblk_forward.1} parent=59 // pred_check_branch
          %2898 = sbr.rel (%p2896) target = $region64
        $region63: #{resblk_forward.1} parent=59 // pred_region
          %s2899 = smul.u32 8, %s29
          %2901 = vsyncadd %s2892, 0
          %s2902 = smul.addr %s28, 8
          %s2903 = sadd.s32 %s2899, %s2902
          %s2904 = smul.addr %s2903, 4
          %s2905 = scalar_lea.hbm %s10, %s2904
          %s2906 = sshll.u32 %s2895, 4
          %s2907 = int_to_ptr.vmem [resolvable:$true] %s2906
          %s2908 = sshll.u32 %s2905, 4
          %s2909 = int_to_ptr.hbm [resolvable:$true] %s2908
          %2914 = dma.vmem_to_hbm [thread:$0]  %s2907, 512, %s2909, %s2892, 64, 64, 4
        $region64: #{resblk_forward.1} parent=59 // pred_fallthru
          _
      $region60: #{resblk_forward.1} parent=5 // pred_fallthru
        _
      %p2915 = scmp.le.s32.totalorder 2, %s19
      // Predicated region
      $region65: #{resblk_forward.1} parent=5 // pred_check
        %p2916 = pneg %p2915
      $region66: #{resblk_forward.1} parent=5 // pred_check_branch
        %2918 = sbr.rel (%p2916) target = $region68
      $region67: #{resblk_forward.1} parent=5 // pred_region
        %s2919 = ssub.s32 %s19, 2
        // Predicated region
        $region69: #{resblk_forward.1} parent=67 // pred_check
          %p2920 = pneg %p277
        $region70: #{resblk_forward.1} parent=67 // pred_check_branch
          %2922 = sbr.rel (%p2920) target = $region72
        $region71: #{resblk_forward.1} parent=67 // pred_region
          %s2923 = sand.u32 %s262, 1
          %s2924 = scalar_lea.sflag [#allocation4], %s2923
          %s2925 = sand.u32 %s262, 1
          %s2926 = smul.addr %s2925, 32
          %s2927 = scalar_lea.vmem [#allocation3], %s2926
          %2929 = dma.done %s2924, 512
        $region72: #{resblk_forward.1} parent=67 // pred_fallthru
          _
      $region68: #{resblk_forward.1} parent=5 // pred_fallthru
        _
    $region6: #{resblk_forward.1} parent=1 // loop_footer
      %s23 = sadd.s32 1, %s19
    $region7: #{resblk_forward.1} parent=1 // loop_footer_branch
      %18 = sbr.rel target = $region3
    $region8: #{resblk_forward.1} parent=1 // loop_exit
      _
    %2930 = vsyncpa [#allocation4], 1
    %s2931 = scalar_lea.sflag [#allocation4], 1
    %2932 = vsyncpa %s2931, 1

</llo_original>
